<compile_context>
chip_gen: v7x
topology: tpu7x:2x2x1
jax: 0.10.0
libtpu: 0.0.40
codegen_flags: <defaults>
</compile_context>

<pallas_src>
import functools
import math

import jax
import jax.numpy as jnp
from jax.experimental import pallas as pl
from jax.experimental.pallas import tpu as pltpu


# ----------------------------------------------------------------------------
# Pallas kernel: one block of `block_b` batch elements per grid step.
# ----------------------------------------------------------------------------
def mla_kernel(x_ref,
               w_in_ref, b_in_ref,     # fused [DQ | DKV | RK]   (E, d_c1+d_c+d_rot)
               w_q_ref, b_q_ref,       # fused [UQ | RQ]*scaler  (d_c1, d_model+H*d_rot)
               w_kv_ref, b_kv_ref,     # fused [UK | UV]         (d_c, 2*d_model)
               wo_ref, bo_ref,         # output_proj             (d_model, d_model)
               out_ref,
               att_scratch,            # VMEM (block_b*S, d_model) f32
               *, block_b, seq_len, num_head, d_head, d_rotate, d_c1, d_c):
    S = seq_len
    d_model = num_head * d_head
    bf16 = jnp.bfloat16
    E = x_ref.shape[-1]

    # Fold batch into the matmul M dimension.
    x = x_ref[...].reshape(block_b * S, E)                       # (M, E) bf16

    # One wide MXU matmul for all three projections that read x.
    xin = jnp.dot(x, w_in_ref[...],
                  preferred_element_type=jnp.float32) + b_in_ref[...]
    c_q = xin[:, :d_c1].astype(bf16)                             # (M, d_c1)
    c_kv = xin[:, d_c1:d_c1 + d_c].astype(bf16)                  # (M, d_c)
    k_rot = xin[:, d_c1 + d_c:]                                  # (M, d_rot) f32

    # Fused up-projections (attention scaler already folded into w_q/b_q).
    q_all = jnp.dot(c_q, w_q_ref[...],
                    preferred_element_type=jnp.float32) + b_q_ref[...]
    kv_all = jnp.dot(c_kv, w_kv_ref[...],
                     preferred_element_type=jnp.float32) + b_kv_ref[...]

    # Per (batch, head) attention.  Rotary rotation is a no-op in the
    # reference forward, so q_rot / k_rot enter the contraction unrotated.
    for b in range(block_b):
        r0 = b * S
        kr_b = k_rot[r0:r0 + S, :].astype(bf16)                  # loop-invariant per b
        for h in range(num_head):
            qh = q_all[r0:r0 + S, h * d_head:(h + 1) * d_head].astype(bf16)
            qrh = q_all[r0:r0 + S,
                        d_model + h * d_rotate:
                        d_model + (h + 1) * d_rotate].astype(bf16)
            kh = kv_all[r0:r0 + S, h * d_head:(h + 1) * d_head].astype(bf16)
            vh = kv_all[r0:r0 + S,
                        d_model + h * d_head:
                        d_model + (h + 1) * d_head].astype(bf16)

            # scores = [qh | qrh] @ [kh | k_rot]^T, decomposed to avoid any
            # lane-dim concatenation; both terms accumulate in f32.
            scores = (jax.lax.dot_general(
                          qh, kh, (((1,), (1,)), ((), ())),
                          preferred_element_type=jnp.float32)
                      + jax.lax.dot_general(
                          qrh, kr_b, (((1,), (1,)), ((), ())),
                          preferred_element_type=jnp.float32))   # (S, S) f32

            scores = scores - jnp.max(scores, axis=-1, keepdims=True)
            p = jnp.exp(scores)
            p = p * pl.reciprocal(jnp.sum(p, axis=-1, keepdims=True),
                                  approx=True)

            att_scratch[r0:r0 + S, h * d_head:(h + 1) * d_head] = jnp.dot(
                p.astype(bf16), vh, preferred_element_type=jnp.float32)

    # Single wide output projection from the scratch accumulator.
    att = att_scratch[...].astype(bf16)                          # (M, d_model)
    out = jnp.dot(att, wo_ref[...],
                  preferred_element_type=jnp.float32) + bo_ref[...]
    out_ref[...] = out.reshape(block_b, S, d_model).astype(out_ref.dtype)


# ----------------------------------------------------------------------------
# Wrapper: fuse weights host-side, cast matmul operands to bf16, launch kernel.
# ----------------------------------------------------------------------------
def mla_forward(sequence, params, *, num_head, d_head, d_rotate, block_b=None):
    B, S, E = sequence.shape
    d_model = num_head * d_head
    scaler = float(1.0 / math.sqrt(d_head + d_rotate))
    d_c1 = params["wuq"].shape[0]
    d_c = params["wuk"].shape[0]

    if block_b is None:
        # Fold batch elements per grid step so block_b*S ~ 128 (fills the MXU
        # M dimension).  For tiny-batch inference on v7x, set block_b=1 so the
        # grid has >=2 parallel steps and both TensorCores get work.
        target = max(1, 128 // max(S, 1))
        block_b = 1
        for cand in range(min(B, target), 0, -1):
            if B % cand == 0:
                block_b = cand
                break
    assert B % block_b == 0

    f32, bf16 = jnp.float32, jnp.bfloat16

    # Fuse weights that share an input (once, outside the kernel).
    w_in = jnp.concatenate([params["wdq"], params["wdkv"], params["wrk"]], axis=1)
    b_in = jnp.concatenate([params["bdq"], params["bdkv"], params["brk"]],
                           axis=1).astype(f32)
    # Fold the attention scaler into the fused [UQ | RQ] projection.
    w_q = jnp.concatenate([params["wuq"], params["wrq"]], axis=1) * scaler
    b_q = (jnp.concatenate([params["buq"], params["brq"]], axis=1)
           * scaler).astype(f32)
    w_kv = jnp.concatenate([params["wuk"], params["wuv"]], axis=1)
    b_kv = jnp.concatenate([params["buk"], params["buv"]], axis=1).astype(f32)
    wo = params["wo"]
    bo = params["bo"].astype(f32)

    # bf16 matmul operands (accumulation stays f32 inside the kernel).
    w_in, w_q, w_kv, wo = (w.astype(bf16) for w in (w_in, w_q, w_kv, wo))
    x = sequence.astype(bf16)

    kern = functools.partial(
        mla_kernel, block_b=block_b, seq_len=S, num_head=num_head,
        d_head=d_head, d_rotate=d_rotate, d_c1=d_c1, d_c=d_c)

    weights = [w_in, b_in, w_q, b_q, w_kv, b_kv, wo, bo]

    def full_spec(arr):
        return pl.BlockSpec(arr.shape, lambda i: (0, 0))   # all weights are 2-D

    in_specs = [pl.BlockSpec((block_b, S, E), lambda i: (i, 0, 0))]
    in_specs += [full_spec(w) for w in weights]
    out_spec = pl.BlockSpec((block_b, S, d_model), lambda i: (i, 0, 0))

    return pl.pallas_call(
        kern,
        out_shape=jax.ShapeDtypeStruct((B, S, d_model), jnp.float32),
        grid=(B // block_b,),
        in_specs=in_specs,
        out_specs=out_spec,
        scratch_shapes=[pltpu.VMEM((block_b * S, d_model), jnp.float32)],
        compiler_params=pltpu.CompilerParams(
            dimension_semantics=("parallel",),
            vmem_limit_bytes=32 * 1024 * 1024),
    )(x, *weights)


# ----------------------------------------------------------------------------
# Pure-JAX reference (mirrors the PyTorch forward exactly, in f32).
# ----------------------------------------------------------------------------
def mla_reference(sequence, params, *, num_head, d_head, d_rotate):
    B, S, E = sequence.shape
    d_model = num_head * d_head
    scaler = 1.0 / math.sqrt(d_head + d_rotate)

    lin = lambda x, w, b: x @ w + b
    c_q = lin(sequence, params["wdq"], params["bdq"])
    q = lin(c_q, params["wuq"], params["buq"])
    q_r = lin(c_q, params["wrq"], params["brq"])
    c_kv = lin(sequence, params["wdkv"], params["bdkv"])
    k_r = lin(sequence, params["wrk"], params["brk"])
    k = lin(c_kv, params["wuk"], params["buk"])
    v = lin(c_kv, params["wuv"], params["buv"])

    q = q.reshape(B, S, num_head, d_head)
    k = k.reshape(B, S, num_head, d_head)
    v = v.reshape(B, S, num_head, d_head)
    q_r = q_r.reshape(B, S, num_head, d_rotate)
    k_r = jnp.broadcast_to(k_r[:, :, None, :], (B, S, num_head, d_rotate))

    q_cat = jnp.concatenate([q, q_r], axis=-1) * scaler
    k_cat = jnp.concatenate([k, k_r], axis=-1)

    q_cat = q_cat.transpose(0, 2, 1, 3)
    k_cat = k_cat.transpose(0, 2, 1, 3)
    v = v.transpose(0, 2, 1, 3)

    scores = jnp.einsum("bhqd,bhkd->bhqk", q_cat, k_cat)
    att = jax.nn.softmax(scores, axis=-1)
    out = jnp.einsum("bhqk,bhkd->bhqd", att, v)
    out = out.transpose(0, 2, 1, 3).reshape(B, S, d_model)
    return lin(out, params["wo"], params["bo"])


# ----------------------------------------------------------------------------
# Deterministic parameter init (PyTorch nn.Linear-style uniform bounds).
# Weights stored as (in_features, out_features) == torch W.T.
# ----------------------------------------------------------------------------
def init_linear(key, d_in, d_out):
    kw, kb = jax.random.split(key)
    bound = 1.0 / math.sqrt(d_in)
    w = jax.random.uniform(kw, (d_in, d_out), jnp.float32, -bound, bound)
    b = jax.random.uniform(kb, (1, d_out), jnp.float32, -bound, bound)
    return w, b


if __name__ == "__main__":
    # Small MLA config.
    B, S = 2, 8
    d_model, num_head = 32, 4
    d_head = d_model // num_head
    d_embed = 32
    d_c, d_c1 = 16, 16
    d_rotate = 8

    key = jax.random.PRNGKey(0)
    keys = jax.random.split(key, 10)

    params = {}
    params["wdkv"], params["bdkv"] = init_linear(keys[0], d_embed, d_c)
    params["wdq"], params["bdq"] = init_linear(keys[1], d_embed, d_c1)
    params["wuq"], params["buq"] = init_linear(keys[2], d_c1, d_model)
    params["wuk"], params["buk"] = init_linear(keys[3], d_c, d_model)
    params["wuv"], params["buv"] = init_linear(keys[4], d_c, d_model)
    params["wrq"], params["brq"] = init_linear(keys[5], d_c1, num_head * d_rotate)
    params["wrk"], params["brk"] = init_linear(keys[6], d_embed, d_rotate)
    params["wo"], params["bo"] = init_linear(keys[7], d_model, d_model)

    # NOTE: precompute_freqs_cis is computed in the torch __init__ but the
    # reference forward() never applies the rotation, so it is omitted here
    # (no effect on outputs).

    sequence = jax.random.normal(keys[8], (B, S, d_embed), jnp.float32)

    out = mla_forward(sequence, params, num_head=num_head,
                      d_head=d_head, d_rotate=d_rotate)
    out = jax.block_until_ready(out)

    ref = mla_reference(sequence, params, num_head=num_head,
                        d_head=d_head, d_rotate=d_rotate)
    assert out.shape == (B, S, d_model)
    # bf16 matmul operands + approx reciprocal → slightly relaxed tolerance.
    assert jnp.allclose(out, ref, atol=2e-2, rtol=2e-2), (
        float(jnp.max(jnp.abs(out - ref))))

    print("KERNEL_OK")
</pallas_src>

<mosaic_0001>
module attributes {stable_mosaic.version = 11 : i64} {
  func.func @mla_kernel(%arg0: i32, %arg1: memref<2x8x32xbf16, #tpu.memory_space<vmem>>, %arg2: memref<32x40xbf16, #tpu.memory_space<vmem>>, %arg3: memref<1x40xf32, #tpu.memory_space<vmem>>, %arg4: memref<16x64xbf16, #tpu.memory_space<vmem>>, %arg5: memref<1x64xf32, #tpu.memory_space<vmem>>, %arg6: memref<16x64xbf16, #tpu.memory_space<vmem>>, %arg7: memref<1x64xf32, #tpu.memory_space<vmem>>, %arg8: memref<32x32xbf16, #tpu.memory_space<vmem>>, %arg9: memref<1x32xf32, #tpu.memory_space<vmem>>, %arg10: memref<2x8x32xf32, #tpu.memory_space<vmem>>, %arg11: memref<16x32xf32, #tpu.memory_space<vmem>>) attributes {dimension_semantics = [#tpu.dimension_semantics<parallel>], iteration_bounds = array<i64: 1>, scalar_prefetch = 0 : i64, scratch_operands = 1 : i64, tpu.core_type = #tpu.core_type<tc>, window_params = [{transform_indices = @transform_0, window_bounds = array<i64: 2, 8, 32>}, {pipeline_mode = #tpu.pipeline_mode<synchronous>, transform_indices = @transform_1, window_bounds = array<i64: 32, 40>}, {pipeline_mode = #tpu.pipeline_mode<synchronous>, transform_indices = @transform_2, window_bounds = array<i64: 1, 40>}, {pipeline_mode = #tpu.pipeline_mode<synchronous>, transform_indices = @transform_3, window_bounds = array<i64: 16, 64>}, {pipeline_mode = #tpu.pipeline_mode<synchronous>, transform_indices = @transform_4, window_bounds = array<i64: 1, 64>}, {pipeline_mode = #tpu.pipeline_mode<synchronous>, transform_indices = @transform_5, window_bounds = array<i64: 16, 64>}, {pipeline_mode = #tpu.pipeline_mode<synchronous>, transform_indices = @transform_6, window_bounds = array<i64: 1, 64>}, {pipeline_mode = #tpu.pipeline_mode<synchronous>, transform_indices = @transform_7, window_bounds = array<i64: 32, 32>}, {pipeline_mode = #tpu.pipeline_mode<synchronous>, transform_indices = @transform_8, window_bounds = array<i64: 1, 32>}, {transform_indices = @transform_9, window_bounds = array<i64: 2, 8, 32>}]} {
    %c0 = arith.constant 0 : index
    %c0_0 = arith.constant 0 : index
    %c0_1 = arith.constant 0 : index
    %0 = vector.load %arg1[%c0, %c0_0, %c0_1] : memref<2x8x32xbf16, #tpu.memory_space<vmem>>, vector<2x8x32xbf16>
    %1 = vector.shape_cast %0 : vector<2x8x32xbf16> to vector<16x32xbf16>
    %c0_2 = arith.constant 0 : index
    %c0_3 = arith.constant 0 : index
    %2 = vector.load %arg2[%c0_2, %c0_3] : memref<32x40xbf16, #tpu.memory_space<vmem>>, vector<32x40xbf16>
    %cst = arith.constant dense<0.000000e+00> : vector<16x40xf32>
    %3 = tpu.matmul %1, %2, %cst {dimension_numbers = #tpu.dot_dimension_numbers<[1], [0], [0], [1], [0, 0, 1, 1], [], []>} : vector<16x32xbf16>, vector<32x40xbf16>, vector<16x40xf32> -> vector<16x40xf32>
    %c0_4 = arith.constant 0 : index
    %c0_5 = arith.constant 0 : index
    %4 = vector.load %arg3[%c0_4, %c0_5] : memref<1x40xf32, #tpu.memory_space<vmem>>, vector<1x40xf32>
    %5 = vector.broadcast %4 : vector<1x40xf32> to vector<16x40xf32>
    %6 = arith.addf %3, %5 : vector<16x40xf32>
    %7 = vector.extract_strided_slice %6 {offsets = [0, 0], sizes = [16, 16], strides = [1, 1]} : vector<16x40xf32> to vector<16x16xf32>
    %8 = arith.truncf %7 : vector<16x16xf32> to vector<16x16xbf16>
    %9 = vector.extract_strided_slice %6 {offsets = [0, 16], sizes = [16, 16], strides = [1, 1]} : vector<16x40xf32> to vector<16x16xf32>
    %10 = arith.truncf %9 : vector<16x16xf32> to vector<16x16xbf16>
    %11 = vector.extract_strided_slice %6 {offsets = [0, 32], sizes = [16, 8], strides = [1, 1]} : vector<16x40xf32> to vector<16x8xf32>
    %c0_6 = arith.constant 0 : index
    %c0_7 = arith.constant 0 : index
    %12 = vector.load %arg4[%c0_6, %c0_7] : memref<16x64xbf16, #tpu.memory_space<vmem>>, vector<16x64xbf16>
    %cst_8 = arith.constant dense<0.000000e+00> : vector<16x64xf32>
    %13 = tpu.matmul %8, %12, %cst_8 {dimension_numbers = #tpu.dot_dimension_numbers<[1], [0], [0], [1], [0, 0, 1, 1], [], []>} : vector<16x16xbf16>, vector<16x64xbf16>, vector<16x64xf32> -> vector<16x64xf32>
    %c0_9 = arith.constant 0 : index
    %c0_10 = arith.constant 0 : index
    %14 = vector.load %arg5[%c0_9, %c0_10] : memref<1x64xf32, #tpu.memory_space<vmem>>, vector<1x64xf32>
    %15 = vector.broadcast %14 : vector<1x64xf32> to vector<16x64xf32>
    %16 = arith.addf %13, %15 : vector<16x64xf32>
    %c0_11 = arith.constant 0 : index
    %c0_12 = arith.constant 0 : index
    %17 = vector.load %arg6[%c0_11, %c0_12] : memref<16x64xbf16, #tpu.memory_space<vmem>>, vector<16x64xbf16>
    %cst_13 = arith.constant dense<0.000000e+00> : vector<16x64xf32>
    %18 = tpu.matmul %10, %17, %cst_13 {dimension_numbers = #tpu.dot_dimension_numbers<[1], [0], [0], [1], [0, 0, 1, 1], [], []>} : vector<16x16xbf16>, vector<16x64xbf16>, vector<16x64xf32> -> vector<16x64xf32>
    %c0_14 = arith.constant 0 : index
    %c0_15 = arith.constant 0 : index
    %19 = vector.load %arg7[%c0_14, %c0_15] : memref<1x64xf32, #tpu.memory_space<vmem>>, vector<1x64xf32>
    %20 = vector.broadcast %19 : vector<1x64xf32> to vector<16x64xf32>
    %21 = arith.addf %18, %20 : vector<16x64xf32>
    %22 = vector.extract_strided_slice %11 {offsets = [0, 0], sizes = [8, 8], strides = [1, 1]} : vector<16x8xf32> to vector<8x8xf32>
    %23 = arith.truncf %22 : vector<8x8xf32> to vector<8x8xbf16>
    %24 = vector.extract_strided_slice %16 {offsets = [0, 0], sizes = [8, 8], strides = [1, 1]} : vector<16x64xf32> to vector<8x8xf32>
    %25 = arith.truncf %24 : vector<8x8xf32> to vector<8x8xbf16>
    %26 = vector.extract_strided_slice %16 {offsets = [0, 32], sizes = [8, 8], strides = [1, 1]} : vector<16x64xf32> to vector<8x8xf32>
    %27 = arith.truncf %26 : vector<8x8xf32> to vector<8x8xbf16>
    %28 = vector.extract_strided_slice %21 {offsets = [0, 0], sizes = [8, 8], strides = [1, 1]} : vector<16x64xf32> to vector<8x8xf32>
    %29 = arith.truncf %28 : vector<8x8xf32> to vector<8x8xbf16>
    %30 = vector.extract_strided_slice %21 {offsets = [0, 32], sizes = [8, 8], strides = [1, 1]} : vector<16x64xf32> to vector<8x8xf32>
    %31 = arith.truncf %30 : vector<8x8xf32> to vector<8x8xbf16>
    %cst_16 = arith.constant dense<0.000000e+00> : vector<8x8xf32>
    %32 = tpu.matmul %25, %29, %cst_16 {dimension_numbers = #tpu.dot_dimension_numbers<[1], [1], [0], [0], [0, 0, 1, 0], [], []>} : vector<8x8xbf16>, vector<8x8xbf16>, vector<8x8xf32> -> vector<8x8xf32>
    %cst_17 = arith.constant dense<0.000000e+00> : vector<8x8xf32>
    %33 = tpu.matmul %27, %23, %cst_17 {dimension_numbers = #tpu.dot_dimension_numbers<[1], [1], [0], [0], [0, 0, 1, 0], [], []>} : vector<8x8xbf16>, vector<8x8xbf16>, vector<8x8xf32> -> vector<8x8xf32>
    %34 = arith.addf %32, %33 : vector<8x8xf32>
    %cst_18 = arith.constant dense<0xFF800000> : vector<8xf32>
    %35 = vector.multi_reduction <maximumf>, %34, %cst_18 [1] : vector<8x8xf32> to vector<8xf32>
    %36 = vector.shape_cast %35 : vector<8xf32> to vector<8x1xf32>
    %37 = vector.broadcast %36 : vector<8x1xf32> to vector<8x8xf32>
    %38 = arith.subf %34, %37 : vector<8x8xf32>
    %39 = math.exp %38 : vector<8x8xf32>
    %cst_19 = arith.constant dense<0.000000e+00> : vector<8xf32>
    %40 = vector.multi_reduction <add>, %39, %cst_19 [1] : vector<8x8xf32> to vector<8xf32>
    %41 = vector.shape_cast %40 : vector<8xf32> to vector<8x1xf32>
    %42 = tpu.reciprocal %41 {approx = true} : vector<8x1xf32> -> vector<8x1xf32>
    %43 = vector.broadcast %42 : vector<8x1xf32> to vector<8x8xf32>
    %44 = arith.mulf %39, %43 : vector<8x8xf32>
    %45 = arith.truncf %44 : vector<8x8xf32> to vector<8x8xbf16>
    %cst_20 = arith.constant dense<0.000000e+00> : vector<8x8xf32>
    %46 = tpu.matmul %45, %31, %cst_20 {dimension_numbers = #tpu.dot_dimension_numbers<[1], [0], [0], [1], [0, 0, 1, 1], [], []>} : vector<8x8xbf16>, vector<8x8xbf16>, vector<8x8xf32> -> vector<8x8xf32>
    %c0_21 = arith.constant 0 : index
    %c0_22 = arith.constant 0 : index
    %47 = vector.load %arg11[%c0_21, %c0_22] : memref<16x32xf32, #tpu.memory_space<vmem>>, vector<8x8xf32>
    tpu.vector_store %arg11[%c0_21, %c0_22], %46 {strides = array<i32>} : memref<16x32xf32, #tpu.memory_space<vmem>>, vector<8x8xf32>,
    %48 = vector.extract_strided_slice %16 {offsets = [0, 8], sizes = [8, 8], strides = [1, 1]} : vector<16x64xf32> to vector<8x8xf32>
    %49 = arith.truncf %48 : vector<8x8xf32> to vector<8x8xbf16>
    %50 = vector.extract_strided_slice %16 {offsets = [0, 40], sizes = [8, 8], strides = [1, 1]} : vector<16x64xf32> to vector<8x8xf32>
    %51 = arith.truncf %50 : vector<8x8xf32> to vector<8x8xbf16>
    %52 = vector.extract_strided_slice %21 {offsets = [0, 8], sizes = [8, 8], strides = [1, 1]} : vector<16x64xf32> to vector<8x8xf32>
    %53 = arith.truncf %52 : vector<8x8xf32> to vector<8x8xbf16>
    %54 = vector.extract_strided_slice %21 {offsets = [0, 40], sizes = [8, 8], strides = [1, 1]} : vector<16x64xf32> to vector<8x8xf32>
    %55 = arith.truncf %54 : vector<8x8xf32> to vector<8x8xbf16>
    %cst_23 = arith.constant dense<0.000000e+00> : vector<8x8xf32>
    %56 = tpu.matmul %49, %53, %cst_23 {dimension_numbers = #tpu.dot_dimension_numbers<[1], [1], [0], [0], [0, 0, 1, 0], [], []>} : vector<8x8xbf16>, vector<8x8xbf16>, vector<8x8xf32> -> vector<8x8xf32>
    %cst_24 = arith.constant dense<0.000000e+00> : vector<8x8xf32>
    %57 = tpu.matmul %51, %23, %cst_24 {dimension_numbers = #tpu.dot_dimension_numbers<[1], [1], [0], [0], [0, 0, 1, 0], [], []>} : vector<8x8xbf16>, vector<8x8xbf16>, vector<8x8xf32> -> vector<8x8xf32>
    %58 = arith.addf %56, %57 : vector<8x8xf32>
    %cst_25 = arith.constant dense<0xFF800000> : vector<8xf32>
    %59 = vector.multi_reduction <maximumf>, %58, %cst_25 [1] : vector<8x8xf32> to vector<8xf32>
    %60 = vector.shape_cast %59 : vector<8xf32> to vector<8x1xf32>
    %61 = vector.broadcast %60 : vector<8x1xf32> to vector<8x8xf32>
    %62 = arith.subf %58, %61 : vector<8x8xf32>
    %63 = math.exp %62 : vector<8x8xf32>
    %cst_26 = arith.constant dense<0.000000e+00> : vector<8xf32>
    %64 = vector.multi_reduction <add>, %63, %cst_26 [1] : vector<8x8xf32> to vector<8xf32>
    %65 = vector.shape_cast %64 : vector<8xf32> to vector<8x1xf32>
    %66 = tpu.reciprocal %65 {approx = true} : vector<8x1xf32> -> vector<8x1xf32>
    %67 = vector.broadcast %66 : vector<8x1xf32> to vector<8x8xf32>
    %68 = arith.mulf %63, %67 : vector<8x8xf32>
    %69 = arith.truncf %68 : vector<8x8xf32> to vector<8x8xbf16>
    %cst_27 = arith.constant dense<0.000000e+00> : vector<8x8xf32>
    %70 = tpu.matmul %69, %55, %cst_27 {dimension_numbers = #tpu.dot_dimension_numbers<[1], [0], [0], [1], [0, 0, 1, 1], [], []>} : vector<8x8xbf16>, vector<8x8xbf16>, vector<8x8xf32> -> vector<8x8xf32>
    %c0_28 = arith.constant 0 : index
    %c8 = arith.constant 8 : index
    %71 = vector.load %arg11[%c0_28, %c8] : memref<16x32xf32, #tpu.memory_space<vmem>>, vector<8x8xf32>
    tpu.vector_store %arg11[%c0_28, %c8], %70 {strides = array<i32>} : memref<16x32xf32, #tpu.memory_space<vmem>>, vector<8x8xf32>,
    %72 = vector.extract_strided_slice %16 {offsets = [0, 16], sizes = [8, 8], strides = [1, 1]} : vector<16x64xf32> to vector<8x8xf32>
    %73 = arith.truncf %72 : vector<8x8xf32> to vector<8x8xbf16>
    %74 = vector.extract_strided_slice %16 {offsets = [0, 48], sizes = [8, 8], strides = [1, 1]} : vector<16x64xf32> to vector<8x8xf32>
    %75 = arith.truncf %74 : vector<8x8xf32> to vector<8x8xbf16>
    %76 = vector.extract_strided_slice %21 {offsets = [0, 16], sizes = [8, 8], strides = [1, 1]} : vector<16x64xf32> to vector<8x8xf32>
    %77 = arith.truncf %76 : vector<8x8xf32> to vector<8x8xbf16>
    %78 = vector.extract_strided_slice %21 {offsets = [0, 48], sizes = [8, 8], strides = [1, 1]} : vector<16x64xf32> to vector<8x8xf32>
    %79 = arith.truncf %78 : vector<8x8xf32> to vector<8x8xbf16>
    %cst_29 = arith.constant dense<0.000000e+00> : vector<8x8xf32>
    %80 = tpu.matmul %73, %77, %cst_29 {dimension_numbers = #tpu.dot_dimension_numbers<[1], [1], [0], [0], [0, 0, 1, 0], [], []>} : vector<8x8xbf16>, vector<8x8xbf16>, vector<8x8xf32> -> vector<8x8xf32>
    %cst_30 = arith.constant dense<0.000000e+00> : vector<8x8xf32>
    %81 = tpu.matmul %75, %23, %cst_30 {dimension_numbers = #tpu.dot_dimension_numbers<[1], [1], [0], [0], [0, 0, 1, 0], [], []>} : vector<8x8xbf16>, vector<8x8xbf16>, vector<8x8xf32> -> vector<8x8xf32>
    %82 = arith.addf %80, %81 : vector<8x8xf32>
    %cst_31 = arith.constant dense<0xFF800000> : vector<8xf32>
    %83 = vector.multi_reduction <maximumf>, %82, %cst_31 [1] : vector<8x8xf32> to vector<8xf32>
    %84 = vector.shape_cast %83 : vector<8xf32> to vector<8x1xf32>
    %85 = vector.broadcast %84 : vector<8x1xf32> to vector<8x8xf32>
    %86 = arith.subf %82, %85 : vector<8x8xf32>
    %87 = math.exp %86 : vector<8x8xf32>
    %cst_32 = arith.constant dense<0.000000e+00> : vector<8xf32>
    %88 = vector.multi_reduction <add>, %87, %cst_32 [1] : vector<8x8xf32> to vector<8xf32>
    %89 = vector.shape_cast %88 : vector<8xf32> to vector<8x1xf32>
    %90 = tpu.reciprocal %89 {approx = true} : vector<8x1xf32> -> vector<8x1xf32>
    %91 = vector.broadcast %90 : vector<8x1xf32> to vector<8x8xf32>
    %92 = arith.mulf %87, %91 : vector<8x8xf32>
    %93 = arith.truncf %92 : vector<8x8xf32> to vector<8x8xbf16>
    %cst_33 = arith.constant dense<0.000000e+00> : vector<8x8xf32>
    %94 = tpu.matmul %93, %79, %cst_33 {dimension_numbers = #tpu.dot_dimension_numbers<[1], [0], [0], [1], [0, 0, 1, 1], [], []>} : vector<8x8xbf16>, vector<8x8xbf16>, vector<8x8xf32> -> vector<8x8xf32>
    %c0_34 = arith.constant 0 : index
    %c16 = arith.constant 16 : index
    %95 = vector.load %arg11[%c0_34, %c16] : memref<16x32xf32, #tpu.memory_space<vmem>>, vector<8x8xf32>
    tpu.vector_store %arg11[%c0_34, %c16], %94 {strides = array<i32>} : memref<16x32xf32, #tpu.memory_space<vmem>>, vector<8x8xf32>,
    %96 = vector.extract_strided_slice %16 {offsets = [0, 24], sizes = [8, 8], strides = [1, 1]} : vector<16x64xf32> to vector<8x8xf32>
    %97 = arith.truncf %96 : vector<8x8xf32> to vector<8x8xbf16>
    %98 = vector.extract_strided_slice %16 {offsets = [0, 56], sizes = [8, 8], strides = [1, 1]} : vector<16x64xf32> to vector<8x8xf32>
    %99 = arith.truncf %98 : vector<8x8xf32> to vector<8x8xbf16>
    %100 = vector.extract_strided_slice %21 {offsets = [0, 24], sizes = [8, 8], strides = [1, 1]} : vector<16x64xf32> to vector<8x8xf32>
    %101 = arith.truncf %100 : vector<8x8xf32> to vector<8x8xbf16>
    %102 = vector.extract_strided_slice %21 {offsets = [0, 56], sizes = [8, 8], strides = [1, 1]} : vector<16x64xf32> to vector<8x8xf32>
    %103 = arith.truncf %102 : vector<8x8xf32> to vector<8x8xbf16>
    %cst_35 = arith.constant dense<0.000000e+00> : vector<8x8xf32>
    %104 = tpu.matmul %97, %101, %cst_35 {dimension_numbers = #tpu.dot_dimension_numbers<[1], [1], [0], [0], [0, 0, 1, 0], [], []>} : vector<8x8xbf16>, vector<8x8xbf16>, vector<8x8xf32> -> vector<8x8xf32>
    %cst_36 = arith.constant dense<0.000000e+00> : vector<8x8xf32>
    %105 = tpu.matmul %99, %23, %cst_36 {dimension_numbers = #tpu.dot_dimension_numbers<[1], [1], [0], [0], [0, 0, 1, 0], [], []>} : vector<8x8xbf16>, vector<8x8xbf16>, vector<8x8xf32> -> vector<8x8xf32>
    %106 = arith.addf %104, %105 : vector<8x8xf32>
    %cst_37 = arith.constant dense<0xFF800000> : vector<8xf32>
    %107 = vector.multi_reduction <maximumf>, %106, %cst_37 [1] : vector<8x8xf32> to vector<8xf32>
    %108 = vector.shape_cast %107 : vector<8xf32> to vector<8x1xf32>
    %109 = vector.broadcast %108 : vector<8x1xf32> to vector<8x8xf32>
    %110 = arith.subf %106, %109 : vector<8x8xf32>
    %111 = math.exp %110 : vector<8x8xf32>
    %cst_38 = arith.constant dense<0.000000e+00> : vector<8xf32>
    %112 = vector.multi_reduction <add>, %111, %cst_38 [1] : vector<8x8xf32> to vector<8xf32>
    %113 = vector.shape_cast %112 : vector<8xf32> to vector<8x1xf32>
    %114 = tpu.reciprocal %113 {approx = true} : vector<8x1xf32> -> vector<8x1xf32>
    %115 = vector.broadcast %114 : vector<8x1xf32> to vector<8x8xf32>
    %116 = arith.mulf %111, %115 : vector<8x8xf32>
    %117 = arith.truncf %116 : vector<8x8xf32> to vector<8x8xbf16>
    %cst_39 = arith.constant dense<0.000000e+00> : vector<8x8xf32>
    %118 = tpu.matmul %117, %103, %cst_39 {dimension_numbers = #tpu.dot_dimension_numbers<[1], [0], [0], [1], [0, 0, 1, 1], [], []>} : vector<8x8xbf16>, vector<8x8xbf16>, vector<8x8xf32> -> vector<8x8xf32>
    %c0_40 = arith.constant 0 : index
    %c24 = arith.constant 24 : index
    %119 = vector.load %arg11[%c0_40, %c24] : memref<16x32xf32, #tpu.memory_space<vmem>>, vector<8x8xf32>
    tpu.vector_store %arg11[%c0_40, %c24], %118 {strides = array<i32>} : memref<16x32xf32, #tpu.memory_space<vmem>>, vector<8x8xf32>,
    %120 = vector.extract_strided_slice %11 {offsets = [8, 0], sizes = [8, 8], strides = [1, 1]} : vector<16x8xf32> to vector<8x8xf32>
    %121 = arith.truncf %120 : vector<8x8xf32> to vector<8x8xbf16>
    %122 = vector.extract_strided_slice %16 {offsets = [8, 0], sizes = [8, 8], strides = [1, 1]} : vector<16x64xf32> to vector<8x8xf32>
    %123 = arith.truncf %122 : vector<8x8xf32> to vector<8x8xbf16>
    %124 = vector.extract_strided_slice %16 {offsets = [8, 32], sizes = [8, 8], strides = [1, 1]} : vector<16x64xf32> to vector<8x8xf32>
    %125 = arith.truncf %124 : vector<8x8xf32> to vector<8x8xbf16>
    %126 = vector.extract_strided_slice %21 {offsets = [8, 0], sizes = [8, 8], strides = [1, 1]} : vector<16x64xf32> to vector<8x8xf32>
    %127 = arith.truncf %126 : vector<8x8xf32> to vector<8x8xbf16>
    %128 = vector.extract_strided_slice %21 {offsets = [8, 32], sizes = [8, 8], strides = [1, 1]} : vector<16x64xf32> to vector<8x8xf32>
    %129 = arith.truncf %128 : vector<8x8xf32> to vector<8x8xbf16>
    %cst_41 = arith.constant dense<0.000000e+00> : vector<8x8xf32>
    %130 = tpu.matmul %123, %127, %cst_41 {dimension_numbers = #tpu.dot_dimension_numbers<[1], [1], [0], [0], [0, 0, 1, 0], [], []>} : vector<8x8xbf16>, vector<8x8xbf16>, vector<8x8xf32> -> vector<8x8xf32>
    %cst_42 = arith.constant dense<0.000000e+00> : vector<8x8xf32>
    %131 = tpu.matmul %125, %121, %cst_42 {dimension_numbers = #tpu.dot_dimension_numbers<[1], [1], [0], [0], [0, 0, 1, 0], [], []>} : vector<8x8xbf16>, vector<8x8xbf16>, vector<8x8xf32> -> vector<8x8xf32>
    %132 = arith.addf %130, %131 : vector<8x8xf32>
    %cst_43 = arith.constant dense<0xFF800000> : vector<8xf32>
    %133 = vector.multi_reduction <maximumf>, %132, %cst_43 [1] : vector<8x8xf32> to vector<8xf32>
    %134 = vector.shape_cast %133 : vector<8xf32> to vector<8x1xf32>
    %135 = vector.broadcast %134 : vector<8x1xf32> to vector<8x8xf32>
    %136 = arith.subf %132, %135 : vector<8x8xf32>
    %137 = math.exp %136 : vector<8x8xf32>
    %cst_44 = arith.constant dense<0.000000e+00> : vector<8xf32>
    %138 = vector.multi_reduction <add>, %137, %cst_44 [1] : vector<8x8xf32> to vector<8xf32>
    %139 = vector.shape_cast %138 : vector<8xf32> to vector<8x1xf32>
    %140 = tpu.reciprocal %139 {approx = true} : vector<8x1xf32> -> vector<8x1xf32>
    %141 = vector.broadcast %140 : vector<8x1xf32> to vector<8x8xf32>
    %142 = arith.mulf %137, %141 : vector<8x8xf32>
    %143 = arith.truncf %142 : vector<8x8xf32> to vector<8x8xbf16>
    %cst_45 = arith.constant dense<0.000000e+00> : vector<8x8xf32>
    %144 = tpu.matmul %143, %129, %cst_45 {dimension_numbers = #tpu.dot_dimension_numbers<[1], [0], [0], [1], [0, 0, 1, 1], [], []>} : vector<8x8xbf16>, vector<8x8xbf16>, vector<8x8xf32> -> vector<8x8xf32>
    %c8_46 = arith.constant 8 : index
    %c0_47 = arith.constant 0 : index
    %145 = vector.load %arg11[%c8_46, %c0_47] : memref<16x32xf32, #tpu.memory_space<vmem>>, vector<8x8xf32>
    tpu.vector_store %arg11[%c8_46, %c0_47], %144 {strides = array<i32>} : memref<16x32xf32, #tpu.memory_space<vmem>>, vector<8x8xf32>,
    %146 = vector.extract_strided_slice %16 {offsets = [8, 8], sizes = [8, 8], strides = [1, 1]} : vector<16x64xf32> to vector<8x8xf32>
    %147 = arith.truncf %146 : vector<8x8xf32> to vector<8x8xbf16>
    %148 = vector.extract_strided_slice %16 {offsets = [8, 40], sizes = [8, 8], strides = [1, 1]} : vector<16x64xf32> to vector<8x8xf32>
    %149 = arith.truncf %148 : vector<8x8xf32> to vector<8x8xbf16>
    %150 = vector.extract_strided_slice %21 {offsets = [8, 8], sizes = [8, 8], strides = [1, 1]} : vector<16x64xf32> to vector<8x8xf32>
    %151 = arith.truncf %150 : vector<8x8xf32> to vector<8x8xbf16>
    %152 = vector.extract_strided_slice %21 {offsets = [8, 40], sizes = [8, 8], strides = [1, 1]} : vector<16x64xf32> to vector<8x8xf32>
    %153 = arith.truncf %152 : vector<8x8xf32> to vector<8x8xbf16>
    %cst_48 = arith.constant dense<0.000000e+00> : vector<8x8xf32>
    %154 = tpu.matmul %147, %151, %cst_48 {dimension_numbers = #tpu.dot_dimension_numbers<[1], [1], [0], [0], [0, 0, 1, 0], [], []>} : vector<8x8xbf16>, vector<8x8xbf16>, vector<8x8xf32> -> vector<8x8xf32>
    %cst_49 = arith.constant dense<0.000000e+00> : vector<8x8xf32>
    %155 = tpu.matmul %149, %121, %cst_49 {dimension_numbers = #tpu.dot_dimension_numbers<[1], [1], [0], [0], [0, 0, 1, 0], [], []>} : vector<8x8xbf16>, vector<8x8xbf16>, vector<8x8xf32> -> vector<8x8xf32>
    %156 = arith.addf %154, %155 : vector<8x8xf32>
    %cst_50 = arith.constant dense<0xFF800000> : vector<8xf32>
    %157 = vector.multi_reduction <maximumf>, %156, %cst_50 [1] : vector<8x8xf32> to vector<8xf32>
    %158 = vector.shape_cast %157 : vector<8xf32> to vector<8x1xf32>
    %159 = vector.broadcast %158 : vector<8x1xf32> to vector<8x8xf32>
    %160 = arith.subf %156, %159 : vector<8x8xf32>
    %161 = math.exp %160 : vector<8x8xf32>
    %cst_51 = arith.constant dense<0.000000e+00> : vector<8xf32>
    %162 = vector.multi_reduction <add>, %161, %cst_51 [1] : vector<8x8xf32> to vector<8xf32>
    %163 = vector.shape_cast %162 : vector<8xf32> to vector<8x1xf32>
    %164 = tpu.reciprocal %163 {approx = true} : vector<8x1xf32> -> vector<8x1xf32>
    %165 = vector.broadcast %164 : vector<8x1xf32> to vector<8x8xf32>
    %166 = arith.mulf %161, %165 : vector<8x8xf32>
    %167 = arith.truncf %166 : vector<8x8xf32> to vector<8x8xbf16>
    %cst_52 = arith.constant dense<0.000000e+00> : vector<8x8xf32>
    %168 = tpu.matmul %167, %153, %cst_52 {dimension_numbers = #tpu.dot_dimension_numbers<[1], [0], [0], [1], [0, 0, 1, 1], [], []>} : vector<8x8xbf16>, vector<8x8xbf16>, vector<8x8xf32> -> vector<8x8xf32>
    %c8_53 = arith.constant 8 : index
    %c8_54 = arith.constant 8 : index
    %169 = vector.load %arg11[%c8_53, %c8_54] : memref<16x32xf32, #tpu.memory_space<vmem>>, vector<8x8xf32>
    tpu.vector_store %arg11[%c8_53, %c8_54], %168 {strides = array<i32>} : memref<16x32xf32, #tpu.memory_space<vmem>>, vector<8x8xf32>,
    %170 = vector.extract_strided_slice %16 {offsets = [8, 16], sizes = [8, 8], strides = [1, 1]} : vector<16x64xf32> to vector<8x8xf32>
    %171 = arith.truncf %170 : vector<8x8xf32> to vector<8x8xbf16>
    %172 = vector.extract_strided_slice %16 {offsets = [8, 48], sizes = [8, 8], strides = [1, 1]} : vector<16x64xf32> to vector<8x8xf32>
    %173 = arith.truncf %172 : vector<8x8xf32> to vector<8x8xbf16>
    %174 = vector.extract_strided_slice %21 {offsets = [8, 16], sizes = [8, 8], strides = [1, 1]} : vector<16x64xf32> to vector<8x8xf32>
    %175 = arith.truncf %174 : vector<8x8xf32> to vector<8x8xbf16>
    %176 = vector.extract_strided_slice %21 {offsets = [8, 48], sizes = [8, 8], strides = [1, 1]} : vector<16x64xf32> to vector<8x8xf32>
    %177 = arith.truncf %176 : vector<8x8xf32> to vector<8x8xbf16>
    %cst_55 = arith.constant dense<0.000000e+00> : vector<8x8xf32>
    %178 = tpu.matmul %171, %175, %cst_55 {dimension_numbers = #tpu.dot_dimension_numbers<[1], [1], [0], [0], [0, 0, 1, 0], [], []>} : vector<8x8xbf16>, vector<8x8xbf16>, vector<8x8xf32> -> vector<8x8xf32>
    %cst_56 = arith.constant dense<0.000000e+00> : vector<8x8xf32>
    %179 = tpu.matmul %173, %121, %cst_56 {dimension_numbers = #tpu.dot_dimension_numbers<[1], [1], [0], [0], [0, 0, 1, 0], [], []>} : vector<8x8xbf16>, vector<8x8xbf16>, vector<8x8xf32> -> vector<8x8xf32>
    %180 = arith.addf %178, %179 : vector<8x8xf32>
    %cst_57 = arith.constant dense<0xFF800000> : vector<8xf32>
    %181 = vector.multi_reduction <maximumf>, %180, %cst_57 [1] : vector<8x8xf32> to vector<8xf32>
    %182 = vector.shape_cast %181 : vector<8xf32> to vector<8x1xf32>
    %183 = vector.broadcast %182 : vector<8x1xf32> to vector<8x8xf32>
    %184 = arith.subf %180, %183 : vector<8x8xf32>
    %185 = math.exp %184 : vector<8x8xf32>
    %cst_58 = arith.constant dense<0.000000e+00> : vector<8xf32>
    %186 = vector.multi_reduction <add>, %185, %cst_58 [1] : vector<8x8xf32> to vector<8xf32>
    %187 = vector.shape_cast %186 : vector<8xf32> to vector<8x1xf32>
    %188 = tpu.reciprocal %187 {approx = true} : vector<8x1xf32> -> vector<8x1xf32>
    %189 = vector.broadcast %188 : vector<8x1xf32> to vector<8x8xf32>
    %190 = arith.mulf %185, %189 : vector<8x8xf32>
    %191 = arith.truncf %190 : vector<8x8xf32> to vector<8x8xbf16>
    %cst_59 = arith.constant dense<0.000000e+00> : vector<8x8xf32>
    %192 = tpu.matmul %191, %177, %cst_59 {dimension_numbers = #tpu.dot_dimension_numbers<[1], [0], [0], [1], [0, 0, 1, 1], [], []>} : vector<8x8xbf16>, vector<8x8xbf16>, vector<8x8xf32> -> vector<8x8xf32>
    %c8_60 = arith.constant 8 : index
    %c16_61 = arith.constant 16 : index
    %193 = vector.load %arg11[%c8_60, %c16_61] : memref<16x32xf32, #tpu.memory_space<vmem>>, vector<8x8xf32>
    tpu.vector_store %arg11[%c8_60, %c16_61], %192 {strides = array<i32>} : memref<16x32xf32, #tpu.memory_space<vmem>>, vector<8x8xf32>,
    %194 = vector.extract_strided_slice %16 {offsets = [8, 24], sizes = [8, 8], strides = [1, 1]} : vector<16x64xf32> to vector<8x8xf32>
    %195 = arith.truncf %194 : vector<8x8xf32> to vector<8x8xbf16>
    %196 = vector.extract_strided_slice %16 {offsets = [8, 56], sizes = [8, 8], strides = [1, 1]} : vector<16x64xf32> to vector<8x8xf32>
    %197 = arith.truncf %196 : vector<8x8xf32> to vector<8x8xbf16>
    %198 = vector.extract_strided_slice %21 {offsets = [8, 24], sizes = [8, 8], strides = [1, 1]} : vector<16x64xf32> to vector<8x8xf32>
    %199 = arith.truncf %198 : vector<8x8xf32> to vector<8x8xbf16>
    %200 = vector.extract_strided_slice %21 {offsets = [8, 56], sizes = [8, 8], strides = [1, 1]} : vector<16x64xf32> to vector<8x8xf32>
    %201 = arith.truncf %200 : vector<8x8xf32> to vector<8x8xbf16>
    %cst_62 = arith.constant dense<0.000000e+00> : vector<8x8xf32>
    %202 = tpu.matmul %195, %199, %cst_62 {dimension_numbers = #tpu.dot_dimension_numbers<[1], [1], [0], [0], [0, 0, 1, 0], [], []>} : vector<8x8xbf16>, vector<8x8xbf16>, vector<8x8xf32> -> vector<8x8xf32>
    %cst_63 = arith.constant dense<0.000000e+00> : vector<8x8xf32>
    %203 = tpu.matmul %197, %121, %cst_63 {dimension_numbers = #tpu.dot_dimension_numbers<[1], [1], [0], [0], [0, 0, 1, 0], [], []>} : vector<8x8xbf16>, vector<8x8xbf16>, vector<8x8xf32> -> vector<8x8xf32>
    %204 = arith.addf %202, %203 : vector<8x8xf32>
    %cst_64 = arith.constant dense<0xFF800000> : vector<8xf32>
    %205 = vector.multi_reduction <maximumf>, %204, %cst_64 [1] : vector<8x8xf32> to vector<8xf32>
    %206 = vector.shape_cast %205 : vector<8xf32> to vector<8x1xf32>
    %207 = vector.broadcast %206 : vector<8x1xf32> to vector<8x8xf32>
    %208 = arith.subf %204, %207 : vector<8x8xf32>
    %209 = math.exp %208 : vector<8x8xf32>
    %cst_65 = arith.constant dense<0.000000e+00> : vector<8xf32>
    %210 = vector.multi_reduction <add>, %209, %cst_65 [1] : vector<8x8xf32> to vector<8xf32>
    %211 = vector.shape_cast %210 : vector<8xf32> to vector<8x1xf32>
    %212 = tpu.reciprocal %211 {approx = true} : vector<8x1xf32> -> vector<8x1xf32>
    %213 = vector.broadcast %212 : vector<8x1xf32> to vector<8x8xf32>
    %214 = arith.mulf %209, %213 : vector<8x8xf32>
    %215 = arith.truncf %214 : vector<8x8xf32> to vector<8x8xbf16>
    %cst_66 = arith.constant dense<0.000000e+00> : vector<8x8xf32>
    %216 = tpu.matmul %215, %201, %cst_66 {dimension_numbers = #tpu.dot_dimension_numbers<[1], [0], [0], [1], [0, 0, 1, 1], [], []>} : vector<8x8xbf16>, vector<8x8xbf16>, vector<8x8xf32> -> vector<8x8xf32>
    %c8_67 = arith.constant 8 : index
    %c24_68 = arith.constant 24 : index
    %217 = vector.load %arg11[%c8_67, %c24_68] : memref<16x32xf32, #tpu.memory_space<vmem>>, vector<8x8xf32>
    tpu.vector_store %arg11[%c8_67, %c24_68], %216 {strides = array<i32>} : memref<16x32xf32, #tpu.memory_space<vmem>>, vector<8x8xf32>,
    %c0_69 = arith.constant 0 : index
    %c0_70 = arith.constant 0 : index
    %218 = vector.load %arg11[%c0_69, %c0_70] : memref<16x32xf32, #tpu.memory_space<vmem>>, vector<16x32xf32>
    %219 = arith.truncf %218 : vector<16x32xf32> to vector<16x32xbf16>
    %c0_71 = arith.constant 0 : index
    %c0_72 = arith.constant 0 : index
    %220 = vector.load %arg8[%c0_71, %c0_72] : memref<32x32xbf16, #tpu.memory_space<vmem>>, vector<32x32xbf16>
    %cst_73 = arith.constant dense<0.000000e+00> : vector<16x32xf32>
    %221 = tpu.matmul %219, %220, %cst_73 {dimension_numbers = #tpu.dot_dimension_numbers<[1], [0], [0], [1], [0, 0, 1, 1], [], []>} : vector<16x32xbf16>, vector<32x32xbf16>, vector<16x32xf32> -> vector<16x32xf32>
    %c0_74 = arith.constant 0 : index
    %c0_75 = arith.constant 0 : index
    %222 = vector.load %arg9[%c0_74, %c0_75] : memref<1x32xf32, #tpu.memory_space<vmem>>, vector<1x32xf32>
    %223 = vector.broadcast %222 : vector<1x32xf32> to vector<16x32xf32>
    %224 = arith.addf %221, %223 : vector<16x32xf32>
    %225 = vector.shape_cast %224 : vector<16x32xf32> to vector<2x8x32xf32>
    %c0_76 = arith.constant 0 : index
    %c0_77 = arith.constant 0 : index
    %c0_78 = arith.constant 0 : index
    %226 = vector.load %arg10[%c0_76, %c0_77, %c0_78] : memref<2x8x32xf32, #tpu.memory_space<vmem>>, vector<2x8x32xf32>
    tpu.vector_store %arg10[%c0_76, %c0_77, %c0_78], %225 {strides = array<i32>} : memref<2x8x32xf32, #tpu.memory_space<vmem>>, vector<2x8x32xf32>,
    return
  }
  func.func @transform_0(%arg0: i32) -> (i32, i32, i32) {
    %c0_i32 = arith.constant 0 : i32
    %c0_i32_0 = arith.constant 0 : i32
    %c0_i32_1 = arith.constant 0 : i32
    return %arg0, %c0_i32, %c0_i32_0 : i32, i32, i32
  }
  func.func @transform_1(%arg0: i32) -> (i32, i32) {
    %c0_i32 = arith.constant 0 : i32
    %c0_i32_0 = arith.constant 0 : i32
    %c0_i32_1 = arith.constant 0 : i32
    return %c0_i32, %c0_i32_0 : i32, i32
  }
  func.func @transform_2(%arg0: i32) -> (i32, i32) {
    %c0_i32 = arith.constant 0 : i32
    %c0_i32_0 = arith.constant 0 : i32
    %c0_i32_1 = arith.constant 0 : i32
    return %c0_i32, %c0_i32_0 : i32, i32
  }
  func.func @transform_3(%arg0: i32) -> (i32, i32) {
    %c0_i32 = arith.constant 0 : i32
    %c0_i32_0 = arith.constant 0 : i32
    %c0_i32_1 = arith.constant 0 : i32
    return %c0_i32, %c0_i32_0 : i32, i32
  }
  func.func @transform_4(%arg0: i32) -> (i32, i32) {
    %c0_i32 = arith.constant 0 : i32
    %c0_i32_0 = arith.constant 0 : i32
    %c0_i32_1 = arith.constant 0 : i32
    return %c0_i32, %c0_i32_0 : i32, i32
  }
  func.func @transform_5(%arg0: i32) -> (i32, i32) {
    %c0_i32 = arith.constant 0 : i32
    %c0_i32_0 = arith.constant 0 : i32
    %c0_i32_1 = arith.constant 0 : i32
    return %c0_i32, %c0_i32_0 : i32, i32
  }
  func.func @transform_6(%arg0: i32) -> (i32, i32) {
    %c0_i32 = arith.constant 0 : i32
    %c0_i32_0 = arith.constant 0 : i32
    %c0_i32_1 = arith.constant 0 : i32
    return %c0_i32, %c0_i32_0 : i32, i32
  }
  func.func @transform_7(%arg0: i32) -> (i32, i32) {
    %c0_i32 = arith.constant 0 : i32
    %c0_i32_0 = arith.constant 0 : i32
    %c0_i32_1 = arith.constant 0 : i32
    return %c0_i32, %c0_i32_0 : i32, i32
  }
  func.func @transform_8(%arg0: i32) -> (i32, i32) {
    %c0_i32 = arith.constant 0 : i32
    %c0_i32_0 = arith.constant 0 : i32
    %c0_i32_1 = arith.constant 0 : i32
    return %c0_i32, %c0_i32_0 : i32, i32
  }
  func.func @transform_9(%arg0: i32) -> (i32, i32, i32) {
    %c0_i32 = arith.constant 0 : i32
    %c0_i32_0 = arith.constant 0 : i32
    %c0_i32_1 = arith.constant 0 : i32
    return %arg0, %c0_i32, %c0_i32_0 : i32, i32, i32
  }
}

</mosaic_0001>

<llo_original>
// kernel: tpu_custom_call.1
$region0: #{tpu_custom_call.1}
  #allocation0 [shape = 'u32[]', space=smem, size = 0x4, offset = 0x4, fixed_abs, tag = 'smem constant byte address 0x4 - core index']
  #allocation1 [shape = 'u32[144,128]{1,0:T(1,128)}', space=vmem, size = 0x12000, scoped, tag = 'internal scratch']
  #allocation2 [shape = 'f32[16,32]{1,0:T(8,128)}', space=vmem, size = 0x2000, scoped, tag = 'scratch operand']
  %s0 = inlined_call_operand.hbm [shape: bf16[2,8,32], index: 0, kind: input, shape index: {}]
  %s1 = inlined_call_operand.hbm [shape: bf16[32,40], index: 1, kind: input, shape index: {}]
  %s2 = inlined_call_operand.vmem [shape: f32[1,40], index: 2, kind: input, shape index: {}]
  %s3 = inlined_call_operand.vmem [shape: bf16[16,64], index: 3, kind: input, shape index: {}]
  %s4 = inlined_call_operand.vmem [shape: f32[1,64], index: 4, kind: input, shape index: {}]
  %s5 = inlined_call_operand.hbm [shape: bf16[16,64], index: 5, kind: input, shape index: {}]
  %s6 = inlined_call_operand.hbm [shape: f32[1,64], index: 6, kind: input, shape index: {}]
  %s7 = inlined_call_operand.vmem [shape: bf16[32,32], index: 7, kind: input, shape index: {}]
  %s8 = inlined_call_operand.vmem [shape: f32[1,32], index: 8, kind: input, shape index: {}]
  %s9 = inlined_call_operand.hbm [shape: f32[2,8,32], index: 9, kind: output, shape index: {}]
  %s10 = sld [smem:[#allocation0]]
  $region62: #{tpu_custom_call.1} parent=0
    _
  %s12 = ssub.s32 1, %s10
  %s13 = scalar_select 0, %s12, %s10
  $region1: #{tpu_custom_call.1} parent=0
    #allocation3 [shape = 'u8[4096]{0}', space=vmem, size = 0x1000, scoped, tag = 'input window, operand 0, single buffered']
    #allocation4 [shape = 's32[1]{0}', space=sflag, size = 0x4, scoped, tag = 'scoped memory for tpu_custom_call.1']
    #allocation5 [shape = 's32[1]{0}', space=sflag, size = 0x4, scoped, tag = 'scoped memory for tpu_custom_call.1']
    #allocation6 [shape = 'u8[8192]{0}', space=vmem, size = 0x2000, scoped, tag = 'input window, operand 1, single buffered']
    #allocation7 [shape = 's32[1]{0}', space=sflag, size = 0x4, scoped, tag = 'scoped memory for tpu_custom_call.1']
    #allocation8 [shape = 'u8[4096]{0}', space=vmem, size = 0x1000, scoped, tag = 'input window, operand 5, single buffered']
    #allocation9 [shape = 'u8[512]{0}', space=vmem, size = 0x400, scoped, tag = 'input window, operand 6, single buffered']
    #allocation10 [shape = 's32[1]{0}', space=sflag, size = 0x4, scoped, tag = 'scoped memory for tpu_custom_call.1']
    #allocation11 [shape = 'u8[8192]{0}', space=vmem, size = 0x2000, scoped, tag = 'output window, operand 0, single buffered']
    %14 = vsyncpa [#allocation4], 0
    %15 = vsyncpa [#allocation7], 0
    %16 = vsyncpa [#allocation10], 0
    %17 = vsyncpa [#allocation5], 0
    // Predicated region
    $region2: #{tpu_custom_call.1} parent=1 // pred_check
      _
    $region3: #{tpu_custom_call.1} parent=1 // pred_check_branch
      %19 = sbr.rel (0) target = $region5
    $region4: #{tpu_custom_call.1} parent=1 // pred_region
      %s21 = ssub.s32 128, 128
      %22 = vsyncadd [#allocation4], %s21
      %s23 = sshll.u32 [#allocation3], 4
      %s24 = int_to_ptr.vmem [resolvable:$true] %s23
      %29 = dma.hbm_to_vmem [thread:$0]  %s0, 128, %s24, [#allocation4], 64, 64, 4
    $region5: #{tpu_custom_call.1} parent=1 // pred_fallthru
      _
    // Predicated region
    $region6: #{tpu_custom_call.1} parent=1 // pred_check
      _
    $region7: #{tpu_custom_call.1} parent=1 // pred_check_branch
      %31 = sbr.rel (0) target = $region9
    $region8: #{tpu_custom_call.1} parent=1 // pred_region
      %s33 = ssub.s32 256, 256
      %34 = vsyncadd [#allocation7], %s33
      %s35 = sshll.u32 [#allocation6], 4
      %s36 = int_to_ptr.vmem [resolvable:$true] %s35
      %41 = dma.hbm_to_vmem [thread:$0]  %s1, 256, %s36, [#allocation7], 64, 64, 4
    $region9: #{tpu_custom_call.1} parent=1 // pred_fallthru
      _
    // Predicated region
    $region10: #{tpu_custom_call.1} parent=1 // pred_check
      _
    $region11: #{tpu_custom_call.1} parent=1 // pred_check_branch
      %43 = sbr.rel (0) target = $region13
    $region12: #{tpu_custom_call.1} parent=1 // pred_region
      _
    $region13: #{tpu_custom_call.1} parent=1 // pred_fallthru
      _
    // Predicated region
    $region14: #{tpu_custom_call.1} parent=1 // pred_check
      _
    $region15: #{tpu_custom_call.1} parent=1 // pred_check_branch
      %45 = sbr.rel (0) target = $region17
    $region16: #{tpu_custom_call.1} parent=1 // pred_region
      _
    $region17: #{tpu_custom_call.1} parent=1 // pred_fallthru
      _
    // Predicated region
    $region18: #{tpu_custom_call.1} parent=1 // pred_check
      _
    $region19: #{tpu_custom_call.1} parent=1 // pred_check_branch
      %47 = sbr.rel (0) target = $region21
    $region20: #{tpu_custom_call.1} parent=1 // pred_region
      _
    $region21: #{tpu_custom_call.1} parent=1 // pred_fallthru
      _
    // Predicated region
    $region22: #{tpu_custom_call.1} parent=1 // pred_check
      _
    $region23: #{tpu_custom_call.1} parent=1 // pred_check_branch
      %49 = sbr.rel (0) target = $region25
    $region24: #{tpu_custom_call.1} parent=1 // pred_region
      %s51 = ssub.s32 128, 128
      %52 = vsyncadd [#allocation7], %s51
      %s53 = sshll.u32 [#allocation8], 4
      %s54 = int_to_ptr.vmem [resolvable:$true] %s53
      %59 = dma.hbm_to_vmem [thread:$0]  %s5, 128, %s54, [#allocation7], 64, 64, 4
    $region25: #{tpu_custom_call.1} parent=1 // pred_fallthru
      _
    // Predicated region
    $region26: #{tpu_custom_call.1} parent=1 // pred_check
      _
    $region27: #{tpu_custom_call.1} parent=1 // pred_check_branch
      %61 = sbr.rel (0) target = $region29
    $region28: #{tpu_custom_call.1} parent=1 // pred_region
      %s63 = ssub.s32 16, 16
      %64 = vsyncadd [#allocation10], %s63
      %s66 = sshll.u32 [#allocation9], 4
      %s67 = int_to_ptr.vmem [resolvable:$true] %s66
      %69 = dma.hbm_to_vmem [thread:$0]  %s6, 16, %s67, [#allocation10]
    $region29: #{tpu_custom_call.1} parent=1 // pred_fallthru
      _
    // Predicated region
    $region30: #{tpu_custom_call.1} parent=1 // pred_check
      _
    $region31: #{tpu_custom_call.1} parent=1 // pred_check_branch
      %71 = sbr.rel (0) target = $region33
    $region32: #{tpu_custom_call.1} parent=1 // pred_region
      _
    $region33: #{tpu_custom_call.1} parent=1 // pred_fallthru
      _
    // Predicated region
    $region34: #{tpu_custom_call.1} parent=1 // pred_check
      _
    $region35: #{tpu_custom_call.1} parent=1 // pred_check_branch
      %73 = sbr.rel (0) target = $region37
    $region36: #{tpu_custom_call.1} parent=1 // pred_region
      _
    $region37: #{tpu_custom_call.1} parent=1 // pred_fallthru
      _
    // Predicated region
    $region38: #{tpu_custom_call.1} parent=1 // pred_check
      _
    $region39: #{tpu_custom_call.1} parent=1 // pred_check_branch
      %75 = sbr.rel (0) target = $region41
    $region40: #{tpu_custom_call.1} parent=1 // pred_region
      %76 = dma.done [#allocation4], 128
    $region41: #{tpu_custom_call.1} parent=1 // pred_fallthru
      _
    // Predicated region
    $region42: #{tpu_custom_call.1} parent=1 // pred_check
      _
    $region43: #{tpu_custom_call.1} parent=1 // pred_check_branch
      %78 = sbr.rel (0) target = $region45
    $region44: #{tpu_custom_call.1} parent=1 // pred_region
      %79 = dma.done [#allocation7], 256
    $region45: #{tpu_custom_call.1} parent=1 // pred_fallthru
      _
    // Predicated region
    $region46: #{tpu_custom_call.1} parent=1 // pred_check
      _
    $region47: #{tpu_custom_call.1} parent=1 // pred_check_branch
      %81 = sbr.rel (0) target = $region49
    $region48: #{tpu_custom_call.1} parent=1 // pred_region
      %82 = dma.done [#allocation7], 128
    $region49: #{tpu_custom_call.1} parent=1 // pred_fallthru
      _
    // Predicated region
    $region50: #{tpu_custom_call.1} parent=1 // pred_check
      _
    $region51: #{tpu_custom_call.1} parent=1 // pred_check_branch
      %84 = sbr.rel (0) target = $region53
    $region52: #{tpu_custom_call.1} parent=1 // pred_region
      %85 = dma.done [#allocation10], 16
    $region53: #{tpu_custom_call.1} parent=1 // pred_fallthru
      _
    %v87 = vld [vmem:[#allocation3] sm:$0xf]
    %v88 = vld [vmem:[#allocation3 + $0x4] sm:$0xf]
    %v89 = vld [vmem:[#allocation6] sm:$0xf]
    %v90 = vld [vmem:[#allocation6 + $0x4] sm:$0xf]
    %v91 = vld [vmem:[#allocation6 + $0x8] sm:$0xf]
    %v92 = vld [vmem:[#allocation6 + $0xc] sm:$0xf]
    %v93 = vld [vmem:[%s2] sm:$0x1]
    %v95 = vlaneseq
    %v96 = vshrl.u32 %v95, 7
    %v97 = vsub.s32 0, %v96
    %v98 = vrot.slane %v93, %v97
    %v102 = vunpack.c.l.b16 %v87
    %v103 = vunpack.c.l.b16 %v88
    %v104 = vpack.c.b16 %v103, %v102
    %v109 = vunpack.c.l.b16 %v89
    %v110 = vunpack.c.l.b16 %v90
    %v111 = vunpack.c.l.b16 %v91
    %v112 = vunpack.c.l.b16 %v92
    %v113 = vpack.c.b16 %v110, %v109
    %v114 = vpack.c.b16 %v112, %v111
    %vm117 = vcmask 261120
    %v119 = vsel %vm117, %v104, 0
    %121 = vmatprep.subr.bf16.mxu0 0
    %122 = vmatpush1.bf16.msra.mxu0 %v113
    %123 = vmatprep.subr.bf16.mxu0 0
    %124 = vmatpush1.bf16.msra.mxu0 %v114
    %125 = vmatprep.subr.bf16.mxu0 0
    %126 = vmatpush1.bf16.msra.mxu0 0
    %127 = vmatprep.subr.bf16.mxu0 0
    %128 = vmatpush1.bf16.msra.mxu0 0
    %129 = vmatprep.subr.bf16.mxu0 0
    %130 = vmatpush1.bf16.msra.mxu0 0
    %131 = vmatprep.subr.bf16.mxu0 0
    %132 = vmatpush1.bf16.msra.mxu0 0
    %133 = vmatprep.subr.bf16.mxu0 0
    %134 = vmatpush1.bf16.msra.mxu0 0
    %135 = vmatprep.subr.bf16.mxu0 0
    %136 = vmatpush1.bf16.msra.mxu0 0
    %137 = vmatprep.subr.bf16.mxu0 0
    %138 = vmatpush1.bf16.msra.mxu0 0
    %139 = vmatprep.subr.bf16.mxu0 0
    %140 = vmatpush1.bf16.msra.mxu0 0
    %141 = vmatprep.subr.bf16.mxu0 0
    %142 = vmatpush1.bf16.msra.mxu0 0
    %143 = vmatprep.subr.bf16.mxu0 0
    %144 = vmatpush1.bf16.msra.mxu0 0
    %145 = vmatprep.subr.bf16.mxu0 0
    %146 = vmatpush1.bf16.msra.mxu0 0
    %147 = vmatprep.subr.bf16.mxu0 0
    %148 = vmatpush1.bf16.msra.mxu0 0
    %149 = vmatprep.subr.bf16.mxu0 0
    %150 = vmatpush1.bf16.msra.mxu0 0
    %151 = vmatprep.subr.bf16.mxu0 0
    %152 = vmatpush1.bf16.msra.mxu0 0
    %153 = vmatprep.mubr.bf16.mxu0 0
    %154 = vmatmul.mubr.bf16.gmra.mrb[0].mxu0 %v119
    %v155 = vpop.f32.mrb[0].mxu0
    %v156 = vadd.f32 %v98, %v155
    %v157 = vpop.f32.mrb[0].mxu0
    %v158 = vpop.f32.mrb[0].mxu0
    %v159 = vadd.f32 %v98, %v158
    %v160 = vpop.f32.mrb[0].mxu0
    %161 = vdwg.mxu0
    %v162 = vpack.c.bf16 %v159, %v156
    %v163 = vld [vmem:[%s3] sm:$0xf]
    %v164 = vld [vmem:[%s3 + $0x4] sm:$0xf]
    %v165 = vld [vmem:[%s4] sm:$0x1]
    %v167 = vlaneseq
    %v168 = vshrl.u32 %v167, 7
    %v169 = vsub.s32 0, %v168
    %v170 = vrot.slane %v165, %v169
    %v174 = vunpack.c.l.b16 %v163
    %v175 = vunpack.c.l.b16 %v164
    %v176 = vpack.c.b16 %v175, %v174
    %vm178 = vcmask 130048
    %v180 = vsel %vm178, %v162, 0
    %182 = vmatprep.subr.bf16.mxu0 0
    %183 = vmatpush1.bf16.msra.mxu0 %v176
    %184 = vmatprep.subr.bf16.mxu0 0
    %185 = vmatpush1.bf16.msra.mxu0 0
    %186 = vmatprep.subr.bf16.mxu0 0
    %187 = vmatpush1.bf16.msra.mxu0 0
    %188 = vmatprep.subr.bf16.mxu0 0
    %189 = vmatpush1.bf16.msra.mxu0 0
    %190 = vmatprep.subr.bf16.mxu0 0
    %191 = vmatpush1.bf16.msra.mxu0 0
    %192 = vmatprep.subr.bf16.mxu0 0
    %193 = vmatpush1.bf16.msra.mxu0 0
    %194 = vmatprep.subr.bf16.mxu0 0
    %195 = vmatpush1.bf16.msra.mxu0 0
    %196 = vmatprep.subr.bf16.mxu0 0
    %197 = vmatpush1.bf16.msra.mxu0 0
    %198 = vmatprep.subr.bf16.mxu0 0
    %199 = vmatpush1.bf16.msra.mxu0 0
    %200 = vmatprep.subr.bf16.mxu0 0
    %201 = vmatpush1.bf16.msra.mxu0 0
    %202 = vmatprep.subr.bf16.mxu0 0
    %203 = vmatpush1.bf16.msra.mxu0 0
    %204 = vmatprep.subr.bf16.mxu0 0
    %205 = vmatpush1.bf16.msra.mxu0 0
    %206 = vmatprep.subr.bf16.mxu0 0
    %207 = vmatpush1.bf16.msra.mxu0 0
    %208 = vmatprep.subr.bf16.mxu0 0
    %209 = vmatpush1.bf16.msra.mxu0 0
    %210 = vmatprep.subr.bf16.mxu0 0
    %211 = vmatpush1.bf16.msra.mxu0 0
    %212 = vmatprep.subr.bf16.mxu0 0
    %213 = vmatpush1.bf16.msra.mxu0 0
    %214 = vmatprep.mubr.bf16.mxu0 0
    %215 = vmatmul.mubr.bf16.gmra.mrb[0].mxu0 %v180
    %v216 = vpop.f32.mrb[0].mxu0
    %v217 = vadd.f32 %v170, %v216
    %v218 = vpop.f32.mrb[0].mxu0
    %v219 = vpop.f32.mrb[0].mxu0
    %v220 = vadd.f32 %v170, %v219
    %v221 = vpop.f32.mrb[0].mxu0
    %222 = vdwg.mxu0
    %v223 = vld [vmem:[#allocation8] sm:$0xf]
    %v224 = vld [vmem:[#allocation8 + $0x4] sm:$0xf]
    %v225 = vld [vmem:[#allocation9] sm:$0x1]
    %v227 = vlaneseq
    %v228 = vshrl.u32 %v227, 7
    %v229 = vsub.s32 0, %v228
    %v230 = vrot.slane %v225, %v229
    %233 = vrot.lane.b32.xlu0 %v162, 112
    %v234 = vpop.permute.xlu0 %233
    %v237 = vunpack.c.l.b16 %v223
    %v238 = vunpack.c.l.b16 %v224
    %v239 = vpack.c.b16 %v238, %v237
    %v242 = vsel %vm178, %v234, 0
    %244 = vmatprep.subr.bf16.mxu0 0
    %245 = vmatpush1.bf16.msra.mxu0 %v239
    %246 = vmatprep.subr.bf16.mxu0 0
    %247 = vmatpush1.bf16.msra.mxu0 0
    %248 = vmatprep.subr.bf16.mxu0 0
    %249 = vmatpush1.bf16.msra.mxu0 0
    %250 = vmatprep.subr.bf16.mxu0 0
    %251 = vmatpush1.bf16.msra.mxu0 0
    %252 = vmatprep.subr.bf16.mxu0 0
    %253 = vmatpush1.bf16.msra.mxu0 0
    %254 = vmatprep.subr.bf16.mxu0 0
    %255 = vmatpush1.bf16.msra.mxu0 0
    %256 = vmatprep.subr.bf16.mxu0 0
    %257 = vmatpush1.bf16.msra.mxu0 0
    %258 = vmatprep.subr.bf16.mxu0 0
    %259 = vmatpush1.bf16.msra.mxu0 0
    %260 = vmatprep.subr.bf16.mxu0 0
    %261 = vmatpush1.bf16.msra.mxu0 0
    %262 = vmatprep.subr.bf16.mxu0 0
    %263 = vmatpush1.bf16.msra.mxu0 0
    %264 = vmatprep.subr.bf16.mxu0 0
    %265 = vmatpush1.bf16.msra.mxu0 0
    %266 = vmatprep.subr.bf16.mxu0 0
    %267 = vmatpush1.bf16.msra.mxu0 0
    %268 = vmatprep.subr.bf16.mxu0 0
    %269 = vmatpush1.bf16.msra.mxu0 0
    %270 = vmatprep.subr.bf16.mxu0 0
    %271 = vmatpush1.bf16.msra.mxu0 0
    %272 = vmatprep.subr.bf16.mxu0 0
    %273 = vmatpush1.bf16.msra.mxu0 0
    %274 = vmatprep.subr.bf16.mxu0 0
    %275 = vmatpush1.bf16.msra.mxu0 0
    %276 = vmatprep.mubr.bf16.mxu0 0
    %277 = vmatmul.mubr.bf16.gmra.mrb[0].mxu0 %v242
    %v278 = vpop.f32.mrb[0].mxu0
    %v279 = vadd.f32 %v230, %v278
    %v280 = vpop.f32.mrb[0].mxu0
    %v281 = vpop.f32.mrb[0].mxu0
    %v282 = vadd.f32 %v230, %v281
    %v283 = vpop.f32.mrb[0].mxu0
    %284 = vdwg.mxu0
    %v285 = vpack.c.bf16 %v156, %v156
    %v286 = vpack.c.bf16 %v217, %v217
    %v287 = vpack.c.bf16 %v279, %v279
    %289 = vrot.lane.b32.xlu0 %v286, 96
    %v290 = vpop.permute.xlu0 %289
    %292 = vrot.lane.b32.xlu0 %v285, 96
    %v293 = vpop.permute.xlu0 %292
    %vm294 = vcmask 64512
    %v296 = vsel %vm294, %v290, 0
    %v299 = vsel %vm294, %v293, 0
    %301 = vmatprep.subr.bf16.mxu0 0
    %302 = vmatpush1.bf16.xpose.msra.mxu0 %v299
    %303 = vmatprep.subr.bf16.mxu0 0
    %304 = vmatpush1.bf16.xpose.msra.mxu0 0
    %305 = vmatprep.subr.bf16.mxu0 0
    %306 = vmatpush1.bf16.xpose.msra.mxu0 0
    %307 = vmatprep.subr.bf16.mxu0 0
    %308 = vmatpush1.bf16.xpose.msra.mxu0 0
    %309 = vmatprep.subr.bf16.mxu0 0
    %310 = vmatpush1.bf16.xpose.msra.mxu0 0
    %311 = vmatprep.subr.bf16.mxu0 0
    %312 = vmatpush1.bf16.xpose.msra.mxu0 0
    %313 = vmatprep.subr.bf16.mxu0 0
    %314 = vmatpush1.bf16.xpose.msra.mxu0 0
    %315 = vmatprep.subr.bf16.mxu0 0
    %316 = vmatpush1.bf16.xpose.msra.mxu0 0
    %317 = vmatprep.subr.bf16.mxu0 0
    %318 = vmatpush1.bf16.xpose.msra.mxu0 0
    %319 = vmatprep.subr.bf16.mxu0 0
    %320 = vmatpush1.bf16.xpose.msra.mxu0 0
    %321 = vmatprep.subr.bf16.mxu0 0
    %322 = vmatpush1.bf16.xpose.msra.mxu0 0
    %323 = vmatprep.subr.bf16.mxu0 0
    %324 = vmatpush1.bf16.xpose.msra.mxu0 0
    %325 = vmatprep.subr.bf16.mxu0 0
    %326 = vmatpush1.bf16.xpose.msra.mxu0 0
    %327 = vmatprep.subr.bf16.mxu0 0
    %328 = vmatpush1.bf16.xpose.msra.mxu0 0
    %329 = vmatprep.subr.bf16.mxu0 0
    %330 = vmatpush1.bf16.xpose.msra.mxu0 0
    %331 = vmatprep.subr.bf16.mxu0 0
    %332 = vmatpush1.bf16.xpose.msra.mxu0 0
    %333 = vmatprep.mubr.bf16.mxu0 0
    %334 = vmatmul.mubr.bf16.gmra.mrb[0].mxu0 %v296
    %v335 = vpop.f32.mrb[0].mxu0
    %v336 = vadd.f32 0.0, %v335
    %v337 = vpop.f32.mrb[0].mxu0
    %v338 = vpop.f32.mrb[0].mxu0
    %v339 = vpop.f32.mrb[0].mxu0
    %340 = vdwg.mxu0
    %v342 = vsel %vm294, %v286, 0
    %v345 = vsel %vm294, %v287, 0
    %347 = vmatprep.subr.bf16.mxu0 0
    %348 = vmatpush1.bf16.xpose.msra.mxu0 %v345
    %349 = vmatprep.subr.bf16.mxu0 0
    %350 = vmatpush1.bf16.xpose.msra.mxu0 0
    %351 = vmatprep.subr.bf16.mxu0 0
    %352 = vmatpush1.bf16.xpose.msra.mxu0 0
    %353 = vmatprep.subr.bf16.mxu0 0
    %354 = vmatpush1.bf16.xpose.msra.mxu0 0
    %355 = vmatprep.subr.bf16.mxu0 0
    %356 = vmatpush1.bf16.xpose.msra.mxu0 0
    %357 = vmatprep.subr.bf16.mxu0 0
    %358 = vmatpush1.bf16.xpose.msra.mxu0 0
    %359 = vmatprep.subr.bf16.mxu0 0
    %360 = vmatpush1.bf16.xpose.msra.mxu0 0
    %361 = vmatprep.subr.bf16.mxu0 0
    %362 = vmatpush1.bf16.xpose.msra.mxu0 0
    %363 = vmatprep.subr.bf16.mxu0 0
    %364 = vmatpush1.bf16.xpose.msra.mxu0 0
    %365 = vmatprep.subr.bf16.mxu0 0
    %366 = vmatpush1.bf16.xpose.msra.mxu0 0
    %367 = vmatprep.subr.bf16.mxu0 0
    %368 = vmatpush1.bf16.xpose.msra.mxu0 0
    %369 = vmatprep.subr.bf16.mxu0 0
    %370 = vmatpush1.bf16.xpose.msra.mxu0 0
    %371 = vmatprep.subr.bf16.mxu0 0
    %372 = vmatpush1.bf16.xpose.msra.mxu0 0
    %373 = vmatprep.subr.bf16.mxu0 0
    %374 = vmatpush1.bf16.xpose.msra.mxu0 0
    %375 = vmatprep.subr.bf16.mxu0 0
    %376 = vmatpush1.bf16.xpose.msra.mxu0 0
    %377 = vmatprep.subr.bf16.mxu0 0
    %378 = vmatpush1.bf16.xpose.msra.mxu0 0
    %379 = vmatprep.mubr.bf16.mxu0 0
    %380 = vmatmul.mubr.bf16.gmra.mrb[0].mxu0 %v342
    %v381 = vpop.f32.mrb[0].mxu0
    %v382 = vadd.f32 %v336, %v381
    %v383 = vpop.f32.mrb[0].mxu0
    %v384 = vpop.f32.mrb[0].mxu0
    %v385 = vpop.f32.mrb[0].mxu0
    %386 = vdwg.mxu0
    %v387 = vsel %vm294, %v382, -inf
    %388 = vmax.xlane.f32.xlu0 %v387
    %v389 = vpop.xlane.xlu0 %388
    %v390 = vsub.f32 %v382, %v389
    %v391 = vmul.f32 %v390, 1.442695
    %v392 = vpow.pop %v391
    %v393 = vsel %vm294, %v392, 0.0
    %394 = vadd.xlane.f32.xlu0 %v393
    %v395 = vpop.xlane.xlu0 %394
    %v396 = vrcp.pop %v395
    %v397 = vmul.f32 %v392, %v396
    %v398 = vpack.c.bf16 %v397, %v397
    %400 = vrot.lane.b32.xlu0 %v287, 96
    %v401 = vpop.permute.xlu0 %400
    %v403 = vsel %vm294, %v398, 0
    %vm405 = vcmask 1043456
    %v407 = vsel %vm405, %v401, 0
    %409 = vmatprep.subr.bf16.mxu0 0
    %410 = vmatpush1.bf16.msra.mxu0 %v407
    %411 = vmatprep.subr.bf16.mxu0 0
    %412 = vmatpush1.bf16.msra.mxu0 0
    %413 = vmatprep.subr.bf16.mxu0 0
    %414 = vmatpush1.bf16.msra.mxu0 0
    %415 = vmatprep.subr.bf16.mxu0 0
    %416 = vmatpush1.bf16.msra.mxu0 0
    %417 = vmatprep.subr.bf16.mxu0 0
    %418 = vmatpush1.bf16.msra.mxu0 0
    %419 = vmatprep.subr.bf16.mxu0 0
    %420 = vmatpush1.bf16.msra.mxu0 0
    %421 = vmatprep.subr.bf16.mxu0 0
    %422 = vmatpush1.bf16.msra.mxu0 0
    %423 = vmatprep.subr.bf16.mxu0 0
    %424 = vmatpush1.bf16.msra.mxu0 0
    %425 = vmatprep.subr.bf16.mxu0 0
    %426 = vmatpush1.bf16.msra.mxu0 0
    %427 = vmatprep.subr.bf16.mxu0 0
    %428 = vmatpush1.bf16.msra.mxu0 0
    %429 = vmatprep.subr.bf16.mxu0 0
    %430 = vmatpush1.bf16.msra.mxu0 0
    %431 = vmatprep.subr.bf16.mxu0 0
    %432 = vmatpush1.bf16.msra.mxu0 0
    %433 = vmatprep.subr.bf16.mxu0 0
    %434 = vmatpush1.bf16.msra.mxu0 0
    %435 = vmatprep.subr.bf16.mxu0 0
    %436 = vmatpush1.bf16.msra.mxu0 0
    %437 = vmatprep.subr.bf16.mxu0 0
    %438 = vmatpush1.bf16.msra.mxu0 0
    %439 = vmatprep.subr.bf16.mxu0 0
    %440 = vmatpush1.bf16.msra.mxu0 0
    %441 = vmatprep.mubr.bf16.mxu0 0
    %442 = vmatmul.mubr.bf16.gmra.mrb[0].mxu0 %v403
    %v443 = vpop.f32.mrb[0].mxu0
    %v444 = vadd.f32 0.0, %v443
    %v445 = vpop.f32.mrb[0].mxu0
    %v446 = vpop.f32.mrb[0].mxu0
    %v447 = vpop.f32.mrb[0].mxu0
    %448 = vdwg.mxu0
    %449 = vst.msk [vmem:[#allocation2] sm:$0xff] %vm294, %v444
    %450 = vrot.lane.b32.xlu0 %v286, 88
    %v451 = vpop.permute.xlu0 %450
    %v453 = vsel %vm294, %v451, 0
    %455 = vmatprep.subr.bf16.mxu0 0
    %456 = vmatpush1.bf16.xpose.msra.mxu0 %v299
    %457 = vmatprep.subr.bf16.mxu0 0
    %458 = vmatpush1.bf16.xpose.msra.mxu0 0
    %459 = vmatprep.subr.bf16.mxu0 0
    %460 = vmatpush1.bf16.xpose.msra.mxu0 0
    %461 = vmatprep.subr.bf16.mxu0 0
    %462 = vmatpush1.bf16.xpose.msra.mxu0 0
    %463 = vmatprep.subr.bf16.mxu0 0
    %464 = vmatpush1.bf16.xpose.msra.mxu0 0
    %465 = vmatprep.subr.bf16.mxu0 0
    %466 = vmatpush1.bf16.xpose.msra.mxu0 0
    %467 = vmatprep.subr.bf16.mxu0 0
    %468 = vmatpush1.bf16.xpose.msra.mxu0 0
    %469 = vmatprep.subr.bf16.mxu0 0
    %470 = vmatpush1.bf16.xpose.msra.mxu0 0
    %471 = vmatprep.subr.bf16.mxu0 0
    %472 = vmatpush1.bf16.xpose.msra.mxu0 0
    %473 = vmatprep.subr.bf16.mxu0 0
    %474 = vmatpush1.bf16.xpose.msra.mxu0 0
    %475 = vmatprep.subr.bf16.mxu0 0
    %476 = vmatpush1.bf16.xpose.msra.mxu0 0
    %477 = vmatprep.subr.bf16.mxu0 0
    %478 = vmatpush1.bf16.xpose.msra.mxu0 0
    %479 = vmatprep.subr.bf16.mxu0 0
    %480 = vmatpush1.bf16.xpose.msra.mxu0 0
    %481 = vmatprep.subr.bf16.mxu0 0
    %482 = vmatpush1.bf16.xpose.msra.mxu0 0
    %483 = vmatprep.subr.bf16.mxu0 0
    %484 = vmatpush1.bf16.xpose.msra.mxu0 0
    %485 = vmatprep.subr.bf16.mxu0 0
    %486 = vmatpush1.bf16.xpose.msra.mxu0 0
    %487 = vmatprep.mubr.bf16.mxu0 0
    %488 = vmatmul.mubr.bf16.gmra.mrb[0].mxu0 %v453
    %v489 = vpop.f32.mrb[0].mxu0
    %v490 = vadd.f32 0.0, %v489
    %v491 = vpop.f32.mrb[0].mxu0
    %v492 = vpop.f32.mrb[0].mxu0
    %v493 = vpop.f32.mrb[0].mxu0
    %494 = vdwg.mxu0
    %495 = vrot.lane.b32.xlu0 %v286, 120
    %v496 = vpop.permute.xlu0 %495
    %497 = vrot.lane.b32.xlu0 %v287, 120
    %v498 = vpop.permute.xlu0 %497
    %v500 = vsel %vm294, %v496, 0
    %v503 = vsel %vm294, %v498, 0
    %505 = vmatprep.subr.bf16.mxu0 0
    %506 = vmatpush1.bf16.xpose.msra.mxu0 %v503
    %507 = vmatprep.subr.bf16.mxu0 0
    %508 = vmatpush1.bf16.xpose.msra.mxu0 0
    %509 = vmatprep.subr.bf16.mxu0 0
    %510 = vmatpush1.bf16.xpose.msra.mxu0 0
    %511 = vmatprep.subr.bf16.mxu0 0
    %512 = vmatpush1.bf16.xpose.msra.mxu0 0
    %513 = vmatprep.subr.bf16.mxu0 0
    %514 = vmatpush1.bf16.xpose.msra.mxu0 0
    %515 = vmatprep.subr.bf16.mxu0 0
    %516 = vmatpush1.bf16.xpose.msra.mxu0 0
    %517 = vmatprep.subr.bf16.mxu0 0
    %518 = vmatpush1.bf16.xpose.msra.mxu0 0
    %519 = vmatprep.subr.bf16.mxu0 0
    %520 = vmatpush1.bf16.xpose.msra.mxu0 0
    %521 = vmatprep.subr.bf16.mxu0 0
    %522 = vmatpush1.bf16.xpose.msra.mxu0 0
    %523 = vmatprep.subr.bf16.mxu0 0
    %524 = vmatpush1.bf16.xpose.msra.mxu0 0
    %525 = vmatprep.subr.bf16.mxu0 0
    %526 = vmatpush1.bf16.xpose.msra.mxu0 0
    %527 = vmatprep.subr.bf16.mxu0 0
    %528 = vmatpush1.bf16.xpose.msra.mxu0 0
    %529 = vmatprep.subr.bf16.mxu0 0
    %530 = vmatpush1.bf16.xpose.msra.mxu0 0
    %531 = vmatprep.subr.bf16.mxu0 0
    %532 = vmatpush1.bf16.xpose.msra.mxu0 0
    %533 = vmatprep.subr.bf16.mxu0 0
    %534 = vmatpush1.bf16.xpose.msra.mxu0 0
    %535 = vmatprep.subr.bf16.mxu0 0
    %536 = vmatpush1.bf16.xpose.msra.mxu0 0
    %537 = vmatprep.mubr.bf16.mxu0 0
    %538 = vmatmul.mubr.bf16.gmra.mrb[0].mxu0 %v500
    %v539 = vpop.f32.mrb[0].mxu0
    %v540 = vadd.f32 %v490, %v539
    %v541 = vpop.f32.mrb[0].mxu0
    %v542 = vpop.f32.mrb[0].mxu0
    %v543 = vpop.f32.mrb[0].mxu0
    %544 = vdwg.mxu0
    %v545 = vsel %vm294, %v540, -inf
    %546 = vmax.xlane.f32.xlu0 %v545
    %v547 = vpop.xlane.xlu0 %546
    %v548 = vsub.f32 %v540, %v547
    %v549 = vmul.f32 %v548, 1.442695
    %v550 = vpow.pop %v549
    %v551 = vsel %vm294, %v550, 0.0
    %552 = vadd.xlane.f32.xlu0 %v551
    %v553 = vpop.xlane.xlu0 %552
    %v554 = vrcp.pop %v553
    %v555 = vmul.f32 %v550, %v554
    %v556 = vpack.c.bf16 %v555, %v555
    %557 = vrot.lane.b32.xlu0 %v287, 88
    %v558 = vpop.permute.xlu0 %557
    %v560 = vsel %vm294, %v556, 0
    %v563 = vsel %vm405, %v558, 0
    %565 = vmatprep.subr.bf16.mxu0 0
    %566 = vmatpush1.bf16.msra.mxu0 %v563
    %567 = vmatprep.subr.bf16.mxu0 0
    %568 = vmatpush1.bf16.msra.mxu0 0
    %569 = vmatprep.subr.bf16.mxu0 0
    %570 = vmatpush1.bf16.msra.mxu0 0
    %571 = vmatprep.subr.bf16.mxu0 0
    %572 = vmatpush1.bf16.msra.mxu0 0
    %573 = vmatprep.subr.bf16.mxu0 0
    %574 = vmatpush1.bf16.msra.mxu0 0
    %575 = vmatprep.subr.bf16.mxu0 0
    %576 = vmatpush1.bf16.msra.mxu0 0
    %577 = vmatprep.subr.bf16.mxu0 0
    %578 = vmatpush1.bf16.msra.mxu0 0
    %579 = vmatprep.subr.bf16.mxu0 0
    %580 = vmatpush1.bf16.msra.mxu0 0
    %581 = vmatprep.subr.bf16.mxu0 0
    %582 = vmatpush1.bf16.msra.mxu0 0
    %583 = vmatprep.subr.bf16.mxu0 0
    %584 = vmatpush1.bf16.msra.mxu0 0
    %585 = vmatprep.subr.bf16.mxu0 0
    %586 = vmatpush1.bf16.msra.mxu0 0
    %587 = vmatprep.subr.bf16.mxu0 0
    %588 = vmatpush1.bf16.msra.mxu0 0
    %589 = vmatprep.subr.bf16.mxu0 0
    %590 = vmatpush1.bf16.msra.mxu0 0
    %591 = vmatprep.subr.bf16.mxu0 0
    %592 = vmatpush1.bf16.msra.mxu0 0
    %593 = vmatprep.subr.bf16.mxu0 0
    %594 = vmatpush1.bf16.msra.mxu0 0
    %595 = vmatprep.subr.bf16.mxu0 0
    %596 = vmatpush1.bf16.msra.mxu0 0
    %597 = vmatprep.mubr.bf16.mxu0 0
    %598 = vmatmul.mubr.bf16.gmra.mrb[0].mxu0 %v560
    %v599 = vpop.f32.mrb[0].mxu0
    %v600 = vadd.f32 0.0, %v599
    %v601 = vpop.f32.mrb[0].mxu0
    %v602 = vpop.f32.mrb[0].mxu0
    %v603 = vpop.f32.mrb[0].mxu0
    %604 = vdwg.mxu0
    %606 = vrot.lane.b32.xlu0 %v600, 8
    %v607 = vpop.permute.xlu0 %606
    %vm609 = vcmask 130112
    %610 = vst.msk [vmem:[#allocation2] sm:$0xff] %vm609, %v607
    %611 = vrot.lane.b32.xlu0 %v286, 80
    %v612 = vpop.permute.xlu0 %611
    %v614 = vsel %vm294, %v612, 0
    %616 = vmatprep.subr.bf16.mxu0 0
    %617 = vmatpush1.bf16.xpose.msra.mxu0 %v299
    %618 = vmatprep.subr.bf16.mxu0 0
    %619 = vmatpush1.bf16.xpose.msra.mxu0 0
    %620 = vmatprep.subr.bf16.mxu0 0
    %621 = vmatpush1.bf16.xpose.msra.mxu0 0
    %622 = vmatprep.subr.bf16.mxu0 0
    %623 = vmatpush1.bf16.xpose.msra.mxu0 0
    %624 = vmatprep.subr.bf16.mxu0 0
    %625 = vmatpush1.bf16.xpose.msra.mxu0 0
    %626 = vmatprep.subr.bf16.mxu0 0
    %627 = vmatpush1.bf16.xpose.msra.mxu0 0
    %628 = vmatprep.subr.bf16.mxu0 0
    %629 = vmatpush1.bf16.xpose.msra.mxu0 0
    %630 = vmatprep.subr.bf16.mxu0 0
    %631 = vmatpush1.bf16.xpose.msra.mxu0 0
    %632 = vmatprep.subr.bf16.mxu0 0
    %633 = vmatpush1.bf16.xpose.msra.mxu0 0
    %634 = vmatprep.subr.bf16.mxu0 0
    %635 = vmatpush1.bf16.xpose.msra.mxu0 0
    %636 = vmatprep.subr.bf16.mxu0 0
    %637 = vmatpush1.bf16.xpose.msra.mxu0 0
    %638 = vmatprep.subr.bf16.mxu0 0
    %639 = vmatpush1.bf16.xpose.msra.mxu0 0
    %640 = vmatprep.subr.bf16.mxu0 0
    %641 = vmatpush1.bf16.xpose.msra.mxu0 0
    %642 = vmatprep.subr.bf16.mxu0 0
    %643 = vmatpush1.bf16.xpose.msra.mxu0 0
    %644 = vmatprep.subr.bf16.mxu0 0
    %645 = vmatpush1.bf16.xpose.msra.mxu0 0
    %646 = vmatprep.subr.bf16.mxu0 0
    %647 = vmatpush1.bf16.xpose.msra.mxu0 0
    %648 = vmatprep.mubr.bf16.mxu0 0
    %649 = vmatmul.mubr.bf16.gmra.mrb[0].mxu0 %v614
    %v650 = vpop.f32.mrb[0].mxu0
    %v651 = vadd.f32 0.0, %v650
    %v652 = vpop.f32.mrb[0].mxu0
    %v653 = vpop.f32.mrb[0].mxu0
    %v654 = vpop.f32.mrb[0].mxu0
    %655 = vdwg.mxu0
    %656 = vrot.lane.b32.xlu0 %v286, 112
    %v657 = vpop.permute.xlu0 %656
    %658 = vrot.lane.b32.xlu0 %v287, 112
    %v659 = vpop.permute.xlu0 %658
    %v661 = vsel %vm294, %v657, 0
    %v664 = vsel %vm294, %v659, 0
    %666 = vmatprep.subr.bf16.mxu0 0
    %667 = vmatpush1.bf16.xpose.msra.mxu0 %v664
    %668 = vmatprep.subr.bf16.mxu0 0
    %669 = vmatpush1.bf16.xpose.msra.mxu0 0
    %670 = vmatprep.subr.bf16.mxu0 0
    %671 = vmatpush1.bf16.xpose.msra.mxu0 0
    %672 = vmatprep.subr.bf16.mxu0 0
    %673 = vmatpush1.bf16.xpose.msra.mxu0 0
    %674 = vmatprep.subr.bf16.mxu0 0
    %675 = vmatpush1.bf16.xpose.msra.mxu0 0
    %676 = vmatprep.subr.bf16.mxu0 0
    %677 = vmatpush1.bf16.xpose.msra.mxu0 0
    %678 = vmatprep.subr.bf16.mxu0 0
    %679 = vmatpush1.bf16.xpose.msra.mxu0 0
    %680 = vmatprep.subr.bf16.mxu0 0
    %681 = vmatpush1.bf16.xpose.msra.mxu0 0
    %682 = vmatprep.subr.bf16.mxu0 0
    %683 = vmatpush1.bf16.xpose.msra.mxu0 0
    %684 = vmatprep.subr.bf16.mxu0 0
    %685 = vmatpush1.bf16.xpose.msra.mxu0 0
    %686 = vmatprep.subr.bf16.mxu0 0
    %687 = vmatpush1.bf16.xpose.msra.mxu0 0
    %688 = vmatprep.subr.bf16.mxu0 0
    %689 = vmatpush1.bf16.xpose.msra.mxu0 0
    %690 = vmatprep.subr.bf16.mxu0 0
    %691 = vmatpush1.bf16.xpose.msra.mxu0 0
    %692 = vmatprep.subr.bf16.mxu0 0
    %693 = vmatpush1.bf16.xpose.msra.mxu0 0
    %694 = vmatprep.subr.bf16.mxu0 0
    %695 = vmatpush1.bf16.xpose.msra.mxu0 0
    %696 = vmatprep.subr.bf16.mxu0 0
    %697 = vmatpush1.bf16.xpose.msra.mxu0 0
    %698 = vmatprep.mubr.bf16.mxu0 0
    %699 = vmatmul.mubr.bf16.gmra.mrb[0].mxu0 %v661
    %v700 = vpop.f32.mrb[0].mxu0
    %v701 = vadd.f32 %v651, %v700
    %v702 = vpop.f32.mrb[0].mxu0
    %v703 = vpop.f32.mrb[0].mxu0
    %v704 = vpop.f32.mrb[0].mxu0
    %705 = vdwg.mxu0
    %v706 = vsel %vm294, %v701, -inf
    %707 = vmax.xlane.f32.xlu0 %v706
    %v708 = vpop.xlane.xlu0 %707
    %v709 = vsub.f32 %v701, %v708
    %v710 = vmul.f32 %v709, 1.442695
    %v711 = vpow.pop %v710
    %v712 = vsel %vm294, %v711, 0.0
    %713 = vadd.xlane.f32.xlu0 %v712
    %v714 = vpop.xlane.xlu0 %713
    %v715 = vrcp.pop %v714
    %v716 = vmul.f32 %v711, %v715
    %v717 = vpack.c.bf16 %v716, %v716
    %718 = vrot.lane.b32.xlu0 %v287, 80
    %v719 = vpop.permute.xlu0 %718
    %v721 = vsel %vm294, %v717, 0
    %v724 = vsel %vm405, %v719, 0
    %726 = vmatprep.subr.bf16.mxu0 0
    %727 = vmatpush1.bf16.msra.mxu0 %v724
    %728 = vmatprep.subr.bf16.mxu0 0
    %729 = vmatpush1.bf16.msra.mxu0 0
    %730 = vmatprep.subr.bf16.mxu0 0
    %731 = vmatpush1.bf16.msra.mxu0 0
    %732 = vmatprep.subr.bf16.mxu0 0
    %733 = vmatpush1.bf16.msra.mxu0 0
    %734 = vmatprep.subr.bf16.mxu0 0
    %735 = vmatpush1.bf16.msra.mxu0 0
    %736 = vmatprep.subr.bf16.mxu0 0
    %737 = vmatpush1.bf16.msra.mxu0 0
    %738 = vmatprep.subr.bf16.mxu0 0
    %739 = vmatpush1.bf16.msra.mxu0 0
    %740 = vmatprep.subr.bf16.mxu0 0
    %741 = vmatpush1.bf16.msra.mxu0 0
    %742 = vmatprep.subr.bf16.mxu0 0
    %743 = vmatpush1.bf16.msra.mxu0 0
    %744 = vmatprep.subr.bf16.mxu0 0
    %745 = vmatpush1.bf16.msra.mxu0 0
    %746 = vmatprep.subr.bf16.mxu0 0
    %747 = vmatpush1.bf16.msra.mxu0 0
    %748 = vmatprep.subr.bf16.mxu0 0
    %749 = vmatpush1.bf16.msra.mxu0 0
    %750 = vmatprep.subr.bf16.mxu0 0
    %751 = vmatpush1.bf16.msra.mxu0 0
    %752 = vmatprep.subr.bf16.mxu0 0
    %753 = vmatpush1.bf16.msra.mxu0 0
    %754 = vmatprep.subr.bf16.mxu0 0
    %755 = vmatpush1.bf16.msra.mxu0 0
    %756 = vmatprep.subr.bf16.mxu0 0
    %757 = vmatpush1.bf16.msra.mxu0 0
    %758 = vmatprep.mubr.bf16.mxu0 0
    %759 = vmatmul.mubr.bf16.gmra.mrb[0].mxu0 %v721
    %v760 = vpop.f32.mrb[0].mxu0
    %v761 = vadd.f32 0.0, %v760
    %v762 = vpop.f32.mrb[0].mxu0
    %v763 = vpop.f32.mrb[0].mxu0
    %v764 = vpop.f32.mrb[0].mxu0
    %765 = vdwg.mxu0
    %767 = vrot.lane.b32.xlu0 %v761, 16
    %v768 = vpop.permute.xlu0 %767
    %vm770 = vcmask 195712
    %771 = vst.msk [vmem:[#allocation2] sm:$0xff] %vm770, %v768
    %772 = vrot.lane.b32.xlu0 %v286, 72
    %v773 = vpop.permute.xlu0 %772
    %v775 = vsel %vm294, %v773, 0
    %777 = vmatprep.subr.bf16.mxu0 0
    %778 = vmatpush1.bf16.xpose.msra.mxu0 %v299
    %779 = vmatprep.subr.bf16.mxu0 0
    %780 = vmatpush1.bf16.xpose.msra.mxu0 0
    %781 = vmatprep.subr.bf16.mxu0 0
    %782 = vmatpush1.bf16.xpose.msra.mxu0 0
    %783 = vmatprep.subr.bf16.mxu0 0
    %784 = vmatpush1.bf16.xpose.msra.mxu0 0
    %785 = vmatprep.subr.bf16.mxu0 0
    %786 = vmatpush1.bf16.xpose.msra.mxu0 0
    %787 = vmatprep.subr.bf16.mxu0 0
    %788 = vmatpush1.bf16.xpose.msra.mxu0 0
    %789 = vmatprep.subr.bf16.mxu0 0
    %790 = vmatpush1.bf16.xpose.msra.mxu0 0
    %791 = vmatprep.subr.bf16.mxu0 0
    %792 = vmatpush1.bf16.xpose.msra.mxu0 0
    %793 = vmatprep.subr.bf16.mxu0 0
    %794 = vmatpush1.bf16.xpose.msra.mxu0 0
    %795 = vmatprep.subr.bf16.mxu0 0
    %796 = vmatpush1.bf16.xpose.msra.mxu0 0
    %797 = vmatprep.subr.bf16.mxu0 0
    %798 = vmatpush1.bf16.xpose.msra.mxu0 0
    %799 = vmatprep.subr.bf16.mxu0 0
    %800 = vmatpush1.bf16.xpose.msra.mxu0 0
    %801 = vmatprep.subr.bf16.mxu0 0
    %802 = vmatpush1.bf16.xpose.msra.mxu0 0
    %803 = vmatprep.subr.bf16.mxu0 0
    %804 = vmatpush1.bf16.xpose.msra.mxu0 0
    %805 = vmatprep.subr.bf16.mxu0 0
    %806 = vmatpush1.bf16.xpose.msra.mxu0 0
    %807 = vmatprep.subr.bf16.mxu0 0
    %808 = vmatpush1.bf16.xpose.msra.mxu0 0
    %809 = vmatprep.mubr.bf16.mxu0 0
    %810 = vmatmul.mubr.bf16.gmra.mrb[0].mxu0 %v775
    %v811 = vpop.f32.mrb[0].mxu0
    %v812 = vadd.f32 0.0, %v811
    %v813 = vpop.f32.mrb[0].mxu0
    %v814 = vpop.f32.mrb[0].mxu0
    %v815 = vpop.f32.mrb[0].mxu0
    %816 = vdwg.mxu0
    %817 = vrot.lane.b32.xlu0 %v286, 104
    %v818 = vpop.permute.xlu0 %817
    %819 = vrot.lane.b32.xlu0 %v287, 104
    %v820 = vpop.permute.xlu0 %819
    %v822 = vsel %vm294, %v818, 0
    %v825 = vsel %vm294, %v820, 0
    %827 = vmatprep.subr.bf16.mxu0 0
    %828 = vmatpush1.bf16.xpose.msra.mxu0 %v825
    %829 = vmatprep.subr.bf16.mxu0 0
    %830 = vmatpush1.bf16.xpose.msra.mxu0 0
    %831 = vmatprep.subr.bf16.mxu0 0
    %832 = vmatpush1.bf16.xpose.msra.mxu0 0
    %833 = vmatprep.subr.bf16.mxu0 0
    %834 = vmatpush1.bf16.xpose.msra.mxu0 0
    %835 = vmatprep.subr.bf16.mxu0 0
    %836 = vmatpush1.bf16.xpose.msra.mxu0 0
    %837 = vmatprep.subr.bf16.mxu0 0
    %838 = vmatpush1.bf16.xpose.msra.mxu0 0
    %839 = vmatprep.subr.bf16.mxu0 0
    %840 = vmatpush1.bf16.xpose.msra.mxu0 0
    %841 = vmatprep.subr.bf16.mxu0 0
    %842 = vmatpush1.bf16.xpose.msra.mxu0 0
    %843 = vmatprep.subr.bf16.mxu0 0
    %844 = vmatpush1.bf16.xpose.msra.mxu0 0
    %845 = vmatprep.subr.bf16.mxu0 0
    %846 = vmatpush1.bf16.xpose.msra.mxu0 0
    %847 = vmatprep.subr.bf16.mxu0 0
    %848 = vmatpush1.bf16.xpose.msra.mxu0 0
    %849 = vmatprep.subr.bf16.mxu0 0
    %850 = vmatpush1.bf16.xpose.msra.mxu0 0
    %851 = vmatprep.subr.bf16.mxu0 0
    %852 = vmatpush1.bf16.xpose.msra.mxu0 0
    %853 = vmatprep.subr.bf16.mxu0 0
    %854 = vmatpush1.bf16.xpose.msra.mxu0 0
    %855 = vmatprep.subr.bf16.mxu0 0
    %856 = vmatpush1.bf16.xpose.msra.mxu0 0
    %857 = vmatprep.subr.bf16.mxu0 0
    %858 = vmatpush1.bf16.xpose.msra.mxu0 0
    %859 = vmatprep.mubr.bf16.mxu0 0
    %860 = vmatmul.mubr.bf16.gmra.mrb[0].mxu0 %v822
    %v861 = vpop.f32.mrb[0].mxu0
    %v862 = vadd.f32 %v812, %v861
    %v863 = vpop.f32.mrb[0].mxu0
    %v864 = vpop.f32.mrb[0].mxu0
    %v865 = vpop.f32.mrb[0].mxu0
    %866 = vdwg.mxu0
    %v867 = vsel %vm294, %v862, -inf
    %868 = vmax.xlane.f32.xlu0 %v867
    %v869 = vpop.xlane.xlu0 %868
    %v870 = vsub.f32 %v862, %v869
    %v871 = vmul.f32 %v870, 1.442695
    %v872 = vpow.pop %v871
    %v873 = vsel %vm294, %v872, 0.0
    %874 = vadd.xlane.f32.xlu0 %v873
    %v875 = vpop.xlane.xlu0 %874
    %v876 = vrcp.pop %v875
    %v877 = vmul.f32 %v872, %v876
    %v878 = vpack.c.bf16 %v877, %v877
    %879 = vrot.lane.b32.xlu0 %v287, 72
    %v880 = vpop.permute.xlu0 %879
    %v882 = vsel %vm294, %v878, 0
    %v885 = vsel %vm405, %v880, 0
    %887 = vmatprep.subr.bf16.mxu0 0
    %888 = vmatpush1.bf16.msra.mxu0 %v885
    %889 = vmatprep.subr.bf16.mxu0 0
    %890 = vmatpush1.bf16.msra.mxu0 0
    %891 = vmatprep.subr.bf16.mxu0 0
    %892 = vmatpush1.bf16.msra.mxu0 0
    %893 = vmatprep.subr.bf16.mxu0 0
    %894 = vmatpush1.bf16.msra.mxu0 0
    %895 = vmatprep.subr.bf16.mxu0 0
    %896 = vmatpush1.bf16.msra.mxu0 0
    %897 = vmatprep.subr.bf16.mxu0 0
    %898 = vmatpush1.bf16.msra.mxu0 0
    %899 = vmatprep.subr.bf16.mxu0 0
    %900 = vmatpush1.bf16.msra.mxu0 0
    %901 = vmatprep.subr.bf16.mxu0 0
    %902 = vmatpush1.bf16.msra.mxu0 0
    %903 = vmatprep.subr.bf16.mxu0 0
    %904 = vmatpush1.bf16.msra.mxu0 0
    %905 = vmatprep.subr.bf16.mxu0 0
    %906 = vmatpush1.bf16.msra.mxu0 0
    %907 = vmatprep.subr.bf16.mxu0 0
    %908 = vmatpush1.bf16.msra.mxu0 0
    %909 = vmatprep.subr.bf16.mxu0 0
    %910 = vmatpush1.bf16.msra.mxu0 0
    %911 = vmatprep.subr.bf16.mxu0 0
    %912 = vmatpush1.bf16.msra.mxu0 0
    %913 = vmatprep.subr.bf16.mxu0 0
    %914 = vmatpush1.bf16.msra.mxu0 0
    %915 = vmatprep.subr.bf16.mxu0 0
    %916 = vmatpush1.bf16.msra.mxu0 0
    %917 = vmatprep.subr.bf16.mxu0 0
    %918 = vmatpush1.bf16.msra.mxu0 0
    %919 = vmatprep.mubr.bf16.mxu0 0
    %920 = vmatmul.mubr.bf16.gmra.mrb[0].mxu0 %v882
    %v921 = vpop.f32.mrb[0].mxu0
    %v922 = vadd.f32 0.0, %v921
    %v923 = vpop.f32.mrb[0].mxu0
    %v924 = vpop.f32.mrb[0].mxu0
    %v925 = vpop.f32.mrb[0].mxu0
    %926 = vdwg.mxu0
    %928 = vrot.lane.b32.xlu0 %v922, 24
    %v929 = vpop.permute.xlu0 %928
    %vm931 = vcmask 261312
    %932 = vst.msk [vmem:[#allocation2] sm:$0xff] %vm931, %v929
    %v933 = vpack.c.bf16 %v159, %v159
    %v934 = vpack.c.bf16 %v220, %v220
    %v935 = vpack.c.bf16 %v282, %v282
    %937 = vrot.lane.b32.xlu0 %v934, 96
    %v938 = vpop.permute.xlu0 %937
    %940 = vrot.lane.b32.xlu0 %v933, 96
    %v941 = vpop.permute.xlu0 %940
    %v943 = vsel %vm294, %v938, 0
    %v946 = vsel %vm294, %v941, 0
    %948 = vmatprep.subr.bf16.mxu0 0
    %949 = vmatpush1.bf16.xpose.msra.mxu0 %v946
    %950 = vmatprep.subr.bf16.mxu0 0
    %951 = vmatpush1.bf16.xpose.msra.mxu0 0
    %952 = vmatprep.subr.bf16.mxu0 0
    %953 = vmatpush1.bf16.xpose.msra.mxu0 0
    %954 = vmatprep.subr.bf16.mxu0 0
    %955 = vmatpush1.bf16.xpose.msra.mxu0 0
    %956 = vmatprep.subr.bf16.mxu0 0
    %957 = vmatpush1.bf16.xpose.msra.mxu0 0
    %958 = vmatprep.subr.bf16.mxu0 0
    %959 = vmatpush1.bf16.xpose.msra.mxu0 0
    %960 = vmatprep.subr.bf16.mxu0 0
    %961 = vmatpush1.bf16.xpose.msra.mxu0 0
    %962 = vmatprep.subr.bf16.mxu0 0
    %963 = vmatpush1.bf16.xpose.msra.mxu0 0
    %964 = vmatprep.subr.bf16.mxu0 0
    %965 = vmatpush1.bf16.xpose.msra.mxu0 0
    %966 = vmatprep.subr.bf16.mxu0 0
    %967 = vmatpush1.bf16.xpose.msra.mxu0 0
    %968 = vmatprep.subr.bf16.mxu0 0
    %969 = vmatpush1.bf16.xpose.msra.mxu0 0
    %970 = vmatprep.subr.bf16.mxu0 0
    %971 = vmatpush1.bf16.xpose.msra.mxu0 0
    %972 = vmatprep.subr.bf16.mxu0 0
    %973 = vmatpush1.bf16.xpose.msra.mxu0 0
    %974 = vmatprep.subr.bf16.mxu0 0
    %975 = vmatpush1.bf16.xpose.msra.mxu0 0
    %976 = vmatprep.subr.bf16.mxu0 0
    %977 = vmatpush1.bf16.xpose.msra.mxu0 0
    %978 = vmatprep.subr.bf16.mxu0 0
    %979 = vmatpush1.bf16.xpose.msra.mxu0 0
    %980 = vmatprep.mubr.bf16.mxu0 0
    %981 = vmatmul.mubr.bf16.gmra.mrb[0].mxu0 %v943
    %v982 = vpop.f32.mrb[0].mxu0
    %v983 = vadd.f32 0.0, %v982
    %v984 = vpop.f32.mrb[0].mxu0
    %v985 = vpop.f32.mrb[0].mxu0
    %v986 = vpop.f32.mrb[0].mxu0
    %987 = vdwg.mxu0
    %v989 = vsel %vm294, %v934, 0
    %v992 = vsel %vm294, %v935, 0
    %994 = vmatprep.subr.bf16.mxu0 0
    %995 = vmatpush1.bf16.xpose.msra.mxu0 %v992
    %996 = vmatprep.subr.bf16.mxu0 0
    %997 = vmatpush1.bf16.xpose.msra.mxu0 0
    %998 = vmatprep.subr.bf16.mxu0 0
    %999 = vmatpush1.bf16.xpose.msra.mxu0 0
    %1000 = vmatprep.subr.bf16.mxu0 0
    %1001 = vmatpush1.bf16.xpose.msra.mxu0 0
    %1002 = vmatprep.subr.bf16.mxu0 0
    %1003 = vmatpush1.bf16.xpose.msra.mxu0 0
    %1004 = vmatprep.subr.bf16.mxu0 0
    %1005 = vmatpush1.bf16.xpose.msra.mxu0 0
    %1006 = vmatprep.subr.bf16.mxu0 0
    %1007 = vmatpush1.bf16.xpose.msra.mxu0 0
    %1008 = vmatprep.subr.bf16.mxu0 0
    %1009 = vmatpush1.bf16.xpose.msra.mxu0 0
    %1010 = vmatprep.subr.bf16.mxu0 0
    %1011 = vmatpush1.bf16.xpose.msra.mxu0 0
    %1012 = vmatprep.subr.bf16.mxu0 0
    %1013 = vmatpush1.bf16.xpose.msra.mxu0 0
    %1014 = vmatprep.subr.bf16.mxu0 0
    %1015 = vmatpush1.bf16.xpose.msra.mxu0 0
    %1016 = vmatprep.subr.bf16.mxu0 0
    %1017 = vmatpush1.bf16.xpose.msra.mxu0 0
    %1018 = vmatprep.subr.bf16.mxu0 0
    %1019 = vmatpush1.bf16.xpose.msra.mxu0 0
    %1020 = vmatprep.subr.bf16.mxu0 0
    %1021 = vmatpush1.bf16.xpose.msra.mxu0 0
    %1022 = vmatprep.subr.bf16.mxu0 0
    %1023 = vmatpush1.bf16.xpose.msra.mxu0 0
    %1024 = vmatprep.subr.bf16.mxu0 0
    %1025 = vmatpush1.bf16.xpose.msra.mxu0 0
    %1026 = vmatprep.mubr.bf16.mxu0 0
    %1027 = vmatmul.mubr.bf16.gmra.mrb[0].mxu0 %v989
    %v1028 = vpop.f32.mrb[0].mxu0
    %v1029 = vadd.f32 %v983, %v1028
    %v1030 = vpop.f32.mrb[0].mxu0
    %v1031 = vpop.f32.mrb[0].mxu0
    %v1032 = vpop.f32.mrb[0].mxu0
    %1033 = vdwg.mxu0
    %v1034 = vsel %vm294, %v1029, -inf
    %1035 = vmax.xlane.f32.xlu0 %v1034
    %v1036 = vpop.xlane.xlu0 %1035
    %v1037 = vsub.f32 %v1029, %v1036
    %v1038 = vmul.f32 %v1037, 1.442695
    %v1039 = vpow.pop %v1038
    %v1040 = vsel %vm294, %v1039, 0.0
    %1041 = vadd.xlane.f32.xlu0 %v1040
    %v1042 = vpop.xlane.xlu0 %1041
    %v1043 = vrcp.pop %v1042
    %v1044 = vmul.f32 %v1039, %v1043
    %v1045 = vpack.c.bf16 %v1044, %v1044
    %1047 = vrot.lane.b32.xlu0 %v935, 96
    %v1048 = vpop.permute.xlu0 %1047
    %v1050 = vsel %vm294, %v1045, 0
    %v1053 = vsel %vm405, %v1048, 0
    %1055 = vmatprep.subr.bf16.mxu0 0
    %1056 = vmatpush1.bf16.msra.mxu0 %v1053
    %1057 = vmatprep.subr.bf16.mxu0 0
    %1058 = vmatpush1.bf16.msra.mxu0 0
    %1059 = vmatprep.subr.bf16.mxu0 0
    %1060 = vmatpush1.bf16.msra.mxu0 0
    %1061 = vmatprep.subr.bf16.mxu0 0
    %1062 = vmatpush1.bf16.msra.mxu0 0
    %1063 = vmatprep.subr.bf16.mxu0 0
    %1064 = vmatpush1.bf16.msra.mxu0 0
    %1065 = vmatprep.subr.bf16.mxu0 0
    %1066 = vmatpush1.bf16.msra.mxu0 0
    %1067 = vmatprep.subr.bf16.mxu0 0
    %1068 = vmatpush1.bf16.msra.mxu0 0
    %1069 = vmatprep.subr.bf16.mxu0 0
    %1070 = vmatpush1.bf16.msra.mxu0 0
    %1071 = vmatprep.subr.bf16.mxu0 0
    %1072 = vmatpush1.bf16.msra.mxu0 0
    %1073 = vmatprep.subr.bf16.mxu0 0
    %1074 = vmatpush1.bf16.msra.mxu0 0
    %1075 = vmatprep.subr.bf16.mxu0 0
    %1076 = vmatpush1.bf16.msra.mxu0 0
    %1077 = vmatprep.subr.bf16.mxu0 0
    %1078 = vmatpush1.bf16.msra.mxu0 0
    %1079 = vmatprep.subr.bf16.mxu0 0
    %1080 = vmatpush1.bf16.msra.mxu0 0
    %1081 = vmatprep.subr.bf16.mxu0 0
    %1082 = vmatpush1.bf16.msra.mxu0 0
    %1083 = vmatprep.subr.bf16.mxu0 0
    %1084 = vmatpush1.bf16.msra.mxu0 0
    %1085 = vmatprep.subr.bf16.mxu0 0
    %1086 = vmatpush1.bf16.msra.mxu0 0
    %1087 = vmatprep.mubr.bf16.mxu0 0
    %1088 = vmatmul.mubr.bf16.gmra.mrb[0].mxu0 %v1050
    %v1089 = vpop.f32.mrb[0].mxu0
    %v1090 = vadd.f32 0.0, %v1089
    %v1091 = vpop.f32.mrb[0].mxu0
    %v1092 = vpop.f32.mrb[0].mxu0
    %v1093 = vpop.f32.mrb[0].mxu0
    %1094 = vdwg.mxu0
    %1095 = vst.msk [vmem:[#allocation2 + $0x8] sm:$0xff] %vm294, %v1090
    %1096 = vrot.lane.b32.xlu0 %v934, 88
    %v1097 = vpop.permute.xlu0 %1096
    %v1099 = vsel %vm294, %v1097, 0
    %1101 = vmatprep.subr.bf16.mxu0 0
    %1102 = vmatpush1.bf16.xpose.msra.mxu0 %v946
    %1103 = vmatprep.subr.bf16.mxu0 0
    %1104 = vmatpush1.bf16.xpose.msra.mxu0 0
    %1105 = vmatprep.subr.bf16.mxu0 0
    %1106 = vmatpush1.bf16.xpose.msra.mxu0 0
    %1107 = vmatprep.subr.bf16.mxu0 0
    %1108 = vmatpush1.bf16.xpose.msra.mxu0 0
    %1109 = vmatprep.subr.bf16.mxu0 0
    %1110 = vmatpush1.bf16.xpose.msra.mxu0 0
    %1111 = vmatprep.subr.bf16.mxu0 0
    %1112 = vmatpush1.bf16.xpose.msra.mxu0 0
    %1113 = vmatprep.subr.bf16.mxu0 0
    %1114 = vmatpush1.bf16.xpose.msra.mxu0 0
    %1115 = vmatprep.subr.bf16.mxu0 0
    %1116 = vmatpush1.bf16.xpose.msra.mxu0 0
    %1117 = vmatprep.subr.bf16.mxu0 0
    %1118 = vmatpush1.bf16.xpose.msra.mxu0 0
    %1119 = vmatprep.subr.bf16.mxu0 0
    %1120 = vmatpush1.bf16.xpose.msra.mxu0 0
    %1121 = vmatprep.subr.bf16.mxu0 0
    %1122 = vmatpush1.bf16.xpose.msra.mxu0 0
    %1123 = vmatprep.subr.bf16.mxu0 0
    %1124 = vmatpush1.bf16.xpose.msra.mxu0 0
    %1125 = vmatprep.subr.bf16.mxu0 0
    %1126 = vmatpush1.bf16.xpose.msra.mxu0 0
    %1127 = vmatprep.subr.bf16.mxu0 0
    %1128 = vmatpush1.bf16.xpose.msra.mxu0 0
    %1129 = vmatprep.subr.bf16.mxu0 0
    %1130 = vmatpush1.bf16.xpose.msra.mxu0 0
    %1131 = vmatprep.subr.bf16.mxu0 0
    %1132 = vmatpush1.bf16.xpose.msra.mxu0 0
    %1133 = vmatprep.mubr.bf16.mxu0 0
    %1134 = vmatmul.mubr.bf16.gmra.mrb[0].mxu0 %v1099
    %v1135 = vpop.f32.mrb[0].mxu0
    %v1136 = vadd.f32 0.0, %v1135
    %v1137 = vpop.f32.mrb[0].mxu0
    %v1138 = vpop.f32.mrb[0].mxu0
    %v1139 = vpop.f32.mrb[0].mxu0
    %1140 = vdwg.mxu0
    %1141 = vrot.lane.b32.xlu0 %v934, 120
    %v1142 = vpop.permute.xlu0 %1141
    %1143 = vrot.lane.b32.xlu0 %v935, 120
    %v1144 = vpop.permute.xlu0 %1143
    %v1146 = vsel %vm294, %v1142, 0
    %v1149 = vsel %vm294, %v1144, 0
    %1151 = vmatprep.subr.bf16.mxu0 0
    %1152 = vmatpush1.bf16.xpose.msra.mxu0 %v1149
    %1153 = vmatprep.subr.bf16.mxu0 0
    %1154 = vmatpush1.bf16.xpose.msra.mxu0 0
    %1155 = vmatprep.subr.bf16.mxu0 0
    %1156 = vmatpush1.bf16.xpose.msra.mxu0 0
    %1157 = vmatprep.subr.bf16.mxu0 0
    %1158 = vmatpush1.bf16.xpose.msra.mxu0 0
    %1159 = vmatprep.subr.bf16.mxu0 0
    %1160 = vmatpush1.bf16.xpose.msra.mxu0 0
    %1161 = vmatprep.subr.bf16.mxu0 0
    %1162 = vmatpush1.bf16.xpose.msra.mxu0 0
    %1163 = vmatprep.subr.bf16.mxu0 0
    %1164 = vmatpush1.bf16.xpose.msra.mxu0 0
    %1165 = vmatprep.subr.bf16.mxu0 0
    %1166 = vmatpush1.bf16.xpose.msra.mxu0 0
    %1167 = vmatprep.subr.bf16.mxu0 0
    %1168 = vmatpush1.bf16.xpose.msra.mxu0 0
    %1169 = vmatprep.subr.bf16.mxu0 0
    %1170 = vmatpush1.bf16.xpose.msra.mxu0 0
    %1171 = vmatprep.subr.bf16.mxu0 0
    %1172 = vmatpush1.bf16.xpose.msra.mxu0 0
    %1173 = vmatprep.subr.bf16.mxu0 0
    %1174 = vmatpush1.bf16.xpose.msra.mxu0 0
    %1175 = vmatprep.subr.bf16.mxu0 0
    %1176 = vmatpush1.bf16.xpose.msra.mxu0 0
    %1177 = vmatprep.subr.bf16.mxu0 0
    %1178 = vmatpush1.bf16.xpose.msra.mxu0 0
    %1179 = vmatprep.subr.bf16.mxu0 0
    %1180 = vmatpush1.bf16.xpose.msra.mxu0 0
    %1181 = vmatprep.subr.bf16.mxu0 0
    %1182 = vmatpush1.bf16.xpose.msra.mxu0 0
    %1183 = vmatprep.mubr.bf16.mxu0 0
    %1184 = vmatmul.mubr.bf16.gmra.mrb[0].mxu0 %v1146
    %v1185 = vpop.f32.mrb[0].mxu0
    %v1186 = vadd.f32 %v1136, %v1185
    %v1187 = vpop.f32.mrb[0].mxu0
    %v1188 = vpop.f32.mrb[0].mxu0
    %v1189 = vpop.f32.mrb[0].mxu0
    %1190 = vdwg.mxu0
    %v1191 = vsel %vm294, %v1186, -inf
    %1192 = vmax.xlane.f32.xlu0 %v1191
    %v1193 = vpop.xlane.xlu0 %1192
    %v1194 = vsub.f32 %v1186, %v1193
    %v1195 = vmul.f32 %v1194, 1.442695
    %v1196 = vpow.pop %v1195
    %v1197 = vsel %vm294, %v1196, 0.0
    %1198 = vadd.xlane.f32.xlu0 %v1197
    %v1199 = vpop.xlane.xlu0 %1198
    %v1200 = vrcp.pop %v1199
    %v1201 = vmul.f32 %v1196, %v1200
    %v1202 = vpack.c.bf16 %v1201, %v1201
    %1203 = vrot.lane.b32.xlu0 %v935, 88
    %v1204 = vpop.permute.xlu0 %1203
    %v1206 = vsel %vm294, %v1202, 0
    %v1209 = vsel %vm405, %v1204, 0
    %1211 = vmatprep.subr.bf16.mxu0 0
    %1212 = vmatpush1.bf16.msra.mxu0 %v1209
    %1213 = vmatprep.subr.bf16.mxu0 0
    %1214 = vmatpush1.bf16.msra.mxu0 0
    %1215 = vmatprep.subr.bf16.mxu0 0
    %1216 = vmatpush1.bf16.msra.mxu0 0
    %1217 = vmatprep.subr.bf16.mxu0 0
    %1218 = vmatpush1.bf16.msra.mxu0 0
    %1219 = vmatprep.subr.bf16.mxu0 0
    %1220 = vmatpush1.bf16.msra.mxu0 0
    %1221 = vmatprep.subr.bf16.mxu0 0
    %1222 = vmatpush1.bf16.msra.mxu0 0
    %1223 = vmatprep.subr.bf16.mxu0 0
    %1224 = vmatpush1.bf16.msra.mxu0 0
    %1225 = vmatprep.subr.bf16.mxu0 0
    %1226 = vmatpush1.bf16.msra.mxu0 0
    %1227 = vmatprep.subr.bf16.mxu0 0
    %1228 = vmatpush1.bf16.msra.mxu0 0
    %1229 = vmatprep.subr.bf16.mxu0 0
    %1230 = vmatpush1.bf16.msra.mxu0 0
    %1231 = vmatprep.subr.bf16.mxu0 0
    %1232 = vmatpush1.bf16.msra.mxu0 0
    %1233 = vmatprep.subr.bf16.mxu0 0
    %1234 = vmatpush1.bf16.msra.mxu0 0
    %1235 = vmatprep.subr.bf16.mxu0 0
    %1236 = vmatpush1.bf16.msra.mxu0 0
    %1237 = vmatprep.subr.bf16.mxu0 0
    %1238 = vmatpush1.bf16.msra.mxu0 0
    %1239 = vmatprep.subr.bf16.mxu0 0
    %1240 = vmatpush1.bf16.msra.mxu0 0
    %1241 = vmatprep.subr.bf16.mxu0 0
    %1242 = vmatpush1.bf16.msra.mxu0 0
    %1243 = vmatprep.mubr.bf16.mxu0 0
    %1244 = vmatmul.mubr.bf16.gmra.mrb[0].mxu0 %v1206
    %v1245 = vpop.f32.mrb[0].mxu0
    %v1246 = vadd.f32 0.0, %v1245
    %v1247 = vpop.f32.mrb[0].mxu0
    %v1248 = vpop.f32.mrb[0].mxu0
    %v1249 = vpop.f32.mrb[0].mxu0
    %1250 = vdwg.mxu0
    %1252 = vrot.lane.b32.xlu0 %v1246, 8
    %v1253 = vpop.permute.xlu0 %1252
    %1255 = vst.msk [vmem:[#allocation2 + $0x8] sm:$0xff] %vm609, %v1253
    %1256 = vrot.lane.b32.xlu0 %v934, 80
    %v1257 = vpop.permute.xlu0 %1256
    %v1259 = vsel %vm294, %v1257, 0
    %1261 = vmatprep.subr.bf16.mxu0 0
    %1262 = vmatpush1.bf16.xpose.msra.mxu0 %v946
    %1263 = vmatprep.subr.bf16.mxu0 0
    %1264 = vmatpush1.bf16.xpose.msra.mxu0 0
    %1265 = vmatprep.subr.bf16.mxu0 0
    %1266 = vmatpush1.bf16.xpose.msra.mxu0 0
    %1267 = vmatprep.subr.bf16.mxu0 0
    %1268 = vmatpush1.bf16.xpose.msra.mxu0 0
    %1269 = vmatprep.subr.bf16.mxu0 0
    %1270 = vmatpush1.bf16.xpose.msra.mxu0 0
    %1271 = vmatprep.subr.bf16.mxu0 0
    %1272 = vmatpush1.bf16.xpose.msra.mxu0 0
    %1273 = vmatprep.subr.bf16.mxu0 0
    %1274 = vmatpush1.bf16.xpose.msra.mxu0 0
    %1275 = vmatprep.subr.bf16.mxu0 0
    %1276 = vmatpush1.bf16.xpose.msra.mxu0 0
    %1277 = vmatprep.subr.bf16.mxu0 0
    %1278 = vmatpush1.bf16.xpose.msra.mxu0 0
    %1279 = vmatprep.subr.bf16.mxu0 0
    %1280 = vmatpush1.bf16.xpose.msra.mxu0 0
    %1281 = vmatprep.subr.bf16.mxu0 0
    %1282 = vmatpush1.bf16.xpose.msra.mxu0 0
    %1283 = vmatprep.subr.bf16.mxu0 0
    %1284 = vmatpush1.bf16.xpose.msra.mxu0 0
    %1285 = vmatprep.subr.bf16.mxu0 0
    %1286 = vmatpush1.bf16.xpose.msra.mxu0 0
    %1287 = vmatprep.subr.bf16.mxu0 0
    %1288 = vmatpush1.bf16.xpose.msra.mxu0 0
    %1289 = vmatprep.subr.bf16.mxu0 0
    %1290 = vmatpush1.bf16.xpose.msra.mxu0 0
    %1291 = vmatprep.subr.bf16.mxu0 0
    %1292 = vmatpush1.bf16.xpose.msra.mxu0 0
    %1293 = vmatprep.mubr.bf16.mxu0 0
    %1294 = vmatmul.mubr.bf16.gmra.mrb[0].mxu0 %v1259
    %v1295 = vpop.f32.mrb[0].mxu0
    %v1296 = vadd.f32 0.0, %v1295
    %v1297 = vpop.f32.mrb[0].mxu0
    %v1298 = vpop.f32.mrb[0].mxu0
    %v1299 = vpop.f32.mrb[0].mxu0
    %1300 = vdwg.mxu0
    %1301 = vrot.lane.b32.xlu0 %v934, 112
    %v1302 = vpop.permute.xlu0 %1301
    %1303 = vrot.lane.b32.xlu0 %v935, 112
    %v1304 = vpop.permute.xlu0 %1303
    %v1306 = vsel %vm294, %v1302, 0
    %v1309 = vsel %vm294, %v1304, 0
    %1311 = vmatprep.subr.bf16.mxu0 0
    %1312 = vmatpush1.bf16.xpose.msra.mxu0 %v1309
    %1313 = vmatprep.subr.bf16.mxu0 0
    %1314 = vmatpush1.bf16.xpose.msra.mxu0 0
    %1315 = vmatprep.subr.bf16.mxu0 0
    %1316 = vmatpush1.bf16.xpose.msra.mxu0 0
    %1317 = vmatprep.subr.bf16.mxu0 0
    %1318 = vmatpush1.bf16.xpose.msra.mxu0 0
    %1319 = vmatprep.subr.bf16.mxu0 0
    %1320 = vmatpush1.bf16.xpose.msra.mxu0 0
    %1321 = vmatprep.subr.bf16.mxu0 0
    %1322 = vmatpush1.bf16.xpose.msra.mxu0 0
    %1323 = vmatprep.subr.bf16.mxu0 0
    %1324 = vmatpush1.bf16.xpose.msra.mxu0 0
    %1325 = vmatprep.subr.bf16.mxu0 0
    %1326 = vmatpush1.bf16.xpose.msra.mxu0 0
    %1327 = vmatprep.subr.bf16.mxu0 0
    %1328 = vmatpush1.bf16.xpose.msra.mxu0 0
    %1329 = vmatprep.subr.bf16.mxu0 0
    %1330 = vmatpush1.bf16.xpose.msra.mxu0 0
    %1331 = vmatprep.subr.bf16.mxu0 0
    %1332 = vmatpush1.bf16.xpose.msra.mxu0 0
    %1333 = vmatprep.subr.bf16.mxu0 0
    %1334 = vmatpush1.bf16.xpose.msra.mxu0 0
    %1335 = vmatprep.subr.bf16.mxu0 0
    %1336 = vmatpush1.bf16.xpose.msra.mxu0 0
    %1337 = vmatprep.subr.bf16.mxu0 0
    %1338 = vmatpush1.bf16.xpose.msra.mxu0 0
    %1339 = vmatprep.subr.bf16.mxu0 0
    %1340 = vmatpush1.bf16.xpose.msra.mxu0 0
    %1341 = vmatprep.subr.bf16.mxu0 0
    %1342 = vmatpush1.bf16.xpose.msra.mxu0 0
    %1343 = vmatprep.mubr.bf16.mxu0 0
    %1344 = vmatmul.mubr.bf16.gmra.mrb[0].mxu0 %v1306
    %v1345 = vpop.f32.mrb[0].mxu0
    %v1346 = vadd.f32 %v1296, %v1345
    %v1347 = vpop.f32.mrb[0].mxu0
    %v1348 = vpop.f32.mrb[0].mxu0
    %v1349 = vpop.f32.mrb[0].mxu0
    %1350 = vdwg.mxu0
    %v1351 = vsel %vm294, %v1346, -inf
    %1352 = vmax.xlane.f32.xlu0 %v1351
    %v1353 = vpop.xlane.xlu0 %1352
    %v1354 = vsub.f32 %v1346, %v1353
    %v1355 = vmul.f32 %v1354, 1.442695
    %v1356 = vpow.pop %v1355
    %v1357 = vsel %vm294, %v1356, 0.0
    %1358 = vadd.xlane.f32.xlu0 %v1357
    %v1359 = vpop.xlane.xlu0 %1358
    %v1360 = vrcp.pop %v1359
    %v1361 = vmul.f32 %v1356, %v1360
    %v1362 = vpack.c.bf16 %v1361, %v1361
    %1363 = vrot.lane.b32.xlu0 %v935, 80
    %v1364 = vpop.permute.xlu0 %1363
    %v1366 = vsel %vm294, %v1362, 0
    %v1369 = vsel %vm405, %v1364, 0
    %1371 = vmatprep.subr.bf16.mxu0 0
    %1372 = vmatpush1.bf16.msra.mxu0 %v1369
    %1373 = vmatprep.subr.bf16.mxu0 0
    %1374 = vmatpush1.bf16.msra.mxu0 0
    %1375 = vmatprep.subr.bf16.mxu0 0
    %1376 = vmatpush1.bf16.msra.mxu0 0
    %1377 = vmatprep.subr.bf16.mxu0 0
    %1378 = vmatpush1.bf16.msra.mxu0 0
    %1379 = vmatprep.subr.bf16.mxu0 0
    %1380 = vmatpush1.bf16.msra.mxu0 0
    %1381 = vmatprep.subr.bf16.mxu0 0
    %1382 = vmatpush1.bf16.msra.mxu0 0
    %1383 = vmatprep.subr.bf16.mxu0 0
    %1384 = vmatpush1.bf16.msra.mxu0 0
    %1385 = vmatprep.subr.bf16.mxu0 0
    %1386 = vmatpush1.bf16.msra.mxu0 0
    %1387 = vmatprep.subr.bf16.mxu0 0
    %1388 = vmatpush1.bf16.msra.mxu0 0
    %1389 = vmatprep.subr.bf16.mxu0 0
    %1390 = vmatpush1.bf16.msra.mxu0 0
    %1391 = vmatprep.subr.bf16.mxu0 0
    %1392 = vmatpush1.bf16.msra.mxu0 0
    %1393 = vmatprep.subr.bf16.mxu0 0
    %1394 = vmatpush1.bf16.msra.mxu0 0
    %1395 = vmatprep.subr.bf16.mxu0 0
    %1396 = vmatpush1.bf16.msra.mxu0 0
    %1397 = vmatprep.subr.bf16.mxu0 0
    %1398 = vmatpush1.bf16.msra.mxu0 0
    %1399 = vmatprep.subr.bf16.mxu0 0
    %1400 = vmatpush1.bf16.msra.mxu0 0
    %1401 = vmatprep.subr.bf16.mxu0 0
    %1402 = vmatpush1.bf16.msra.mxu0 0
    %1403 = vmatprep.mubr.bf16.mxu0 0
    %1404 = vmatmul.mubr.bf16.gmra.mrb[0].mxu0 %v1366
    %v1405 = vpop.f32.mrb[0].mxu0
    %v1406 = vadd.f32 0.0, %v1405
    %v1407 = vpop.f32.mrb[0].mxu0
    %v1408 = vpop.f32.mrb[0].mxu0
    %v1409 = vpop.f32.mrb[0].mxu0
    %1410 = vdwg.mxu0
    %1412 = vrot.lane.b32.xlu0 %v1406, 16
    %v1413 = vpop.permute.xlu0 %1412
    %1415 = vst.msk [vmem:[#allocation2 + $0x8] sm:$0xff] %vm770, %v1413
    %1416 = vrot.lane.b32.xlu0 %v934, 72
    %v1417 = vpop.permute.xlu0 %1416
    %v1419 = vsel %vm294, %v1417, 0
    %1421 = vmatprep.subr.bf16.mxu0 0
    %1422 = vmatpush1.bf16.xpose.msra.mxu0 %v946
    %1423 = vmatprep.subr.bf16.mxu0 0
    %1424 = vmatpush1.bf16.xpose.msra.mxu0 0
    %1425 = vmatprep.subr.bf16.mxu0 0
    %1426 = vmatpush1.bf16.xpose.msra.mxu0 0
    %1427 = vmatprep.subr.bf16.mxu0 0
    %1428 = vmatpush1.bf16.xpose.msra.mxu0 0
    %1429 = vmatprep.subr.bf16.mxu0 0
    %1430 = vmatpush1.bf16.xpose.msra.mxu0 0
    %1431 = vmatprep.subr.bf16.mxu0 0
    %1432 = vmatpush1.bf16.xpose.msra.mxu0 0
    %1433 = vmatprep.subr.bf16.mxu0 0
    %1434 = vmatpush1.bf16.xpose.msra.mxu0 0
    %1435 = vmatprep.subr.bf16.mxu0 0
    %1436 = vmatpush1.bf16.xpose.msra.mxu0 0
    %1437 = vmatprep.subr.bf16.mxu0 0
    %1438 = vmatpush1.bf16.xpose.msra.mxu0 0
    %1439 = vmatprep.subr.bf16.mxu0 0
    %1440 = vmatpush1.bf16.xpose.msra.mxu0 0
    %1441 = vmatprep.subr.bf16.mxu0 0
    %1442 = vmatpush1.bf16.xpose.msra.mxu0 0
    %1443 = vmatprep.subr.bf16.mxu0 0
    %1444 = vmatpush1.bf16.xpose.msra.mxu0 0
    %1445 = vmatprep.subr.bf16.mxu0 0
    %1446 = vmatpush1.bf16.xpose.msra.mxu0 0
    %1447 = vmatprep.subr.bf16.mxu0 0
    %1448 = vmatpush1.bf16.xpose.msra.mxu0 0
    %1449 = vmatprep.subr.bf16.mxu0 0
    %1450 = vmatpush1.bf16.xpose.msra.mxu0 0
    %1451 = vmatprep.subr.bf16.mxu0 0
    %1452 = vmatpush1.bf16.xpose.msra.mxu0 0
    %1453 = vmatprep.mubr.bf16.mxu0 0
    %1454 = vmatmul.mubr.bf16.gmra.mrb[0].mxu0 %v1419
    %v1455 = vpop.f32.mrb[0].mxu0
    %v1456 = vadd.f32 0.0, %v1455
    %v1457 = vpop.f32.mrb[0].mxu0
    %v1458 = vpop.f32.mrb[0].mxu0
    %v1459 = vpop.f32.mrb[0].mxu0
    %1460 = vdwg.mxu0
    %1461 = vrot.lane.b32.xlu0 %v934, 104
    %v1462 = vpop.permute.xlu0 %1461
    %1463 = vrot.lane.b32.xlu0 %v935, 104
    %v1464 = vpop.permute.xlu0 %1463
    %v1466 = vsel %vm294, %v1462, 0
    %v1469 = vsel %vm294, %v1464, 0
    %1471 = vmatprep.subr.bf16.mxu0 0
    %1472 = vmatpush1.bf16.xpose.msra.mxu0 %v1469
    %1473 = vmatprep.subr.bf16.mxu0 0
    %1474 = vmatpush1.bf16.xpose.msra.mxu0 0
    %1475 = vmatprep.subr.bf16.mxu0 0
    %1476 = vmatpush1.bf16.xpose.msra.mxu0 0
    %1477 = vmatprep.subr.bf16.mxu0 0
    %1478 = vmatpush1.bf16.xpose.msra.mxu0 0
    %1479 = vmatprep.subr.bf16.mxu0 0
    %1480 = vmatpush1.bf16.xpose.msra.mxu0 0
    %1481 = vmatprep.subr.bf16.mxu0 0
    %1482 = vmatpush1.bf16.xpose.msra.mxu0 0
    %1483 = vmatprep.subr.bf16.mxu0 0
    %1484 = vmatpush1.bf16.xpose.msra.mxu0 0
    %1485 = vmatprep.subr.bf16.mxu0 0
    %1486 = vmatpush1.bf16.xpose.msra.mxu0 0
    %1487 = vmatprep.subr.bf16.mxu0 0
    %1488 = vmatpush1.bf16.xpose.msra.mxu0 0
    %1489 = vmatprep.subr.bf16.mxu0 0
    %1490 = vmatpush1.bf16.xpose.msra.mxu0 0
    %1491 = vmatprep.subr.bf16.mxu0 0
    %1492 = vmatpush1.bf16.xpose.msra.mxu0 0
    %1493 = vmatprep.subr.bf16.mxu0 0
    %1494 = vmatpush1.bf16.xpose.msra.mxu0 0
    %1495 = vmatprep.subr.bf16.mxu0 0
    %1496 = vmatpush1.bf16.xpose.msra.mxu0 0
    %1497 = vmatprep.subr.bf16.mxu0 0
    %1498 = vmatpush1.bf16.xpose.msra.mxu0 0
    %1499 = vmatprep.subr.bf16.mxu0 0
    %1500 = vmatpush1.bf16.xpose.msra.mxu0 0
    %1501 = vmatprep.subr.bf16.mxu0 0
    %1502 = vmatpush1.bf16.xpose.msra.mxu0 0
    %1503 = vmatprep.mubr.bf16.mxu0 0
    %1504 = vmatmul.mubr.bf16.gmra.mrb[0].mxu0 %v1466
    %v1505 = vpop.f32.mrb[0].mxu0
    %v1506 = vadd.f32 %v1456, %v1505
    %v1507 = vpop.f32.mrb[0].mxu0
    %v1508 = vpop.f32.mrb[0].mxu0
    %v1509 = vpop.f32.mrb[0].mxu0
    %1510 = vdwg.mxu0
    %v1511 = vsel %vm294, %v1506, -inf
    %1512 = vmax.xlane.f32.xlu0 %v1511
    %v1513 = vpop.xlane.xlu0 %1512
    %v1514 = vsub.f32 %v1506, %v1513
    %v1515 = vmul.f32 %v1514, 1.442695
    %v1516 = vpow.pop %v1515
    %v1517 = vsel %vm294, %v1516, 0.0
    %1518 = vadd.xlane.f32.xlu0 %v1517
    %v1519 = vpop.xlane.xlu0 %1518
    %v1520 = vrcp.pop %v1519
    %v1521 = vmul.f32 %v1516, %v1520
    %v1522 = vpack.c.bf16 %v1521, %v1521
    %1523 = vrot.lane.b32.xlu0 %v935, 72
    %v1524 = vpop.permute.xlu0 %1523
    %v1526 = vsel %vm294, %v1522, 0
    %v1529 = vsel %vm405, %v1524, 0
    %1531 = vmatprep.subr.bf16.mxu0 0
    %1532 = vmatpush1.bf16.msra.mxu0 %v1529
    %1533 = vmatprep.subr.bf16.mxu0 0
    %1534 = vmatpush1.bf16.msra.mxu0 0
    %1535 = vmatprep.subr.bf16.mxu0 0
    %1536 = vmatpush1.bf16.msra.mxu0 0
    %1537 = vmatprep.subr.bf16.mxu0 0
    %1538 = vmatpush1.bf16.msra.mxu0 0
    %1539 = vmatprep.subr.bf16.mxu0 0
    %1540 = vmatpush1.bf16.msra.mxu0 0
    %1541 = vmatprep.subr.bf16.mxu0 0
    %1542 = vmatpush1.bf16.msra.mxu0 0
    %1543 = vmatprep.subr.bf16.mxu0 0
    %1544 = vmatpush1.bf16.msra.mxu0 0
    %1545 = vmatprep.subr.bf16.mxu0 0
    %1546 = vmatpush1.bf16.msra.mxu0 0
    %1547 = vmatprep.subr.bf16.mxu0 0
    %1548 = vmatpush1.bf16.msra.mxu0 0
    %1549 = vmatprep.subr.bf16.mxu0 0
    %1550 = vmatpush1.bf16.msra.mxu0 0
    %1551 = vmatprep.subr.bf16.mxu0 0
    %1552 = vmatpush1.bf16.msra.mxu0 0
    %1553 = vmatprep.subr.bf16.mxu0 0
    %1554 = vmatpush1.bf16.msra.mxu0 0
    %1555 = vmatprep.subr.bf16.mxu0 0
    %1556 = vmatpush1.bf16.msra.mxu0 0
    %1557 = vmatprep.subr.bf16.mxu0 0
    %1558 = vmatpush1.bf16.msra.mxu0 0
    %1559 = vmatprep.subr.bf16.mxu0 0
    %1560 = vmatpush1.bf16.msra.mxu0 0
    %1561 = vmatprep.subr.bf16.mxu0 0
    %1562 = vmatpush1.bf16.msra.mxu0 0
    %1563 = vmatprep.mubr.bf16.mxu0 0
    %1564 = vmatmul.mubr.bf16.gmra.mrb[0].mxu0 %v1526
    %v1565 = vpop.f32.mrb[0].mxu0
    %v1566 = vadd.f32 0.0, %v1565
    %v1567 = vpop.f32.mrb[0].mxu0
    %v1568 = vpop.f32.mrb[0].mxu0
    %v1569 = vpop.f32.mrb[0].mxu0
    %1570 = vdwg.mxu0
    %1572 = vrot.lane.b32.xlu0 %v1566, 24
    %v1573 = vpop.permute.xlu0 %1572
    %1575 = vst.msk [vmem:[#allocation2 + $0x8] sm:$0xff] %vm931, %v1573
    %v1576 = vld [vmem:[#allocation2] sm:$0xff]
    %v1577 = vld [vmem:[#allocation2 + $0x8] sm:$0xff]
    %v1578 = vpack.c.bf16 %v1577, %v1576
    %v1579 = vld [vmem:[%s7] sm:$0xf]
    %v1580 = vld [vmem:[%s7 + $0x4] sm:$0xf]
    %v1581 = vld [vmem:[%s7 + $0x8] sm:$0xf]
    %v1582 = vld [vmem:[%s7 + $0xc] sm:$0xf]
    %v1583 = vld [vmem:[%s8] sm:$0x1]
    %v1585 = vlaneseq
    %v1586 = vshrl.u32 %v1585, 7
    %v1587 = vsub.s32 0, %v1586
    %v1588 = vrot.slane %v1583, %v1587
    %v1594 = vunpack.c.l.b16 %v1579
    %v1595 = vunpack.c.l.b16 %v1580
    %v1596 = vunpack.c.l.b16 %v1581
    %v1597 = vunpack.c.l.b16 %v1582
    %v1598 = vpack.c.b16 %v1595, %v1594
    %v1599 = vpack.c.b16 %v1597, %v1596
    %v1603 = vsel %vm117, %v1578, 0
    %1605 = vmatprep.subr.bf16.mxu0 0
    %1606 = vmatpush1.bf16.msra.mxu0 %v1598
    %1607 = vmatprep.subr.bf16.mxu0 0
    %1608 = vmatpush1.bf16.msra.mxu0 %v1599
    %1609 = vmatprep.subr.bf16.mxu0 0
    %1610 = vmatpush1.bf16.msra.mxu0 0
    %1611 = vmatprep.subr.bf16.mxu0 0
    %1612 = vmatpush1.bf16.msra.mxu0 0
    %1613 = vmatprep.subr.bf16.mxu0 0
    %1614 = vmatpush1.bf16.msra.mxu0 0
    %1615 = vmatprep.subr.bf16.mxu0 0
    %1616 = vmatpush1.bf16.msra.mxu0 0
    %1617 = vmatprep.subr.bf16.mxu0 0
    %1618 = vmatpush1.bf16.msra.mxu0 0
    %1619 = vmatprep.subr.bf16.mxu0 0
    %1620 = vmatpush1.bf16.msra.mxu0 0
    %1621 = vmatprep.subr.bf16.mxu0 0
    %1622 = vmatpush1.bf16.msra.mxu0 0
    %1623 = vmatprep.subr.bf16.mxu0 0
    %1624 = vmatpush1.bf16.msra.mxu0 0
    %1625 = vmatprep.subr.bf16.mxu0 0
    %1626 = vmatpush1.bf16.msra.mxu0 0
    %1627 = vmatprep.subr.bf16.mxu0 0
    %1628 = vmatpush1.bf16.msra.mxu0 0
    %1629 = vmatprep.subr.bf16.mxu0 0
    %1630 = vmatpush1.bf16.msra.mxu0 0
    %1631 = vmatprep.subr.bf16.mxu0 0
    %1632 = vmatpush1.bf16.msra.mxu0 0
    %1633 = vmatprep.subr.bf16.mxu0 0
    %1634 = vmatpush1.bf16.msra.mxu0 0
    %1635 = vmatprep.subr.bf16.mxu0 0
    %1636 = vmatpush1.bf16.msra.mxu0 0
    %1637 = vmatprep.mubr.bf16.mxu0 0
    %1638 = vmatmul.mubr.bf16.gmra.mrb[0].mxu0 %v1603
    %v1639 = vpop.f32.mrb[0].mxu0
    %v1640 = vadd.f32 %v1588, %v1639
    %v1641 = vpop.f32.mrb[0].mxu0
    %v1642 = vpop.f32.mrb[0].mxu0
    %v1643 = vadd.f32 %v1588, %v1642
    %v1644 = vpop.f32.mrb[0].mxu0
    %1645 = vdwg.mxu0
    %1646 = vst.msk [vmem:[#allocation11] sm:$0xff] %vm117, %v1640
    %1647 = vst.msk [vmem:[#allocation11 + $0x8] sm:$0xff] %vm117, %v1643
    // Predicated region
    $region54: #{tpu_custom_call.1} parent=1 // pred_check
      _
    $region55: #{tpu_custom_call.1} parent=1 // pred_check_branch
      %1649 = sbr.rel (0) target = $region57
    $region56: #{tpu_custom_call.1} parent=1 // pred_region
      %s1651 = ssub.s32 256, 256
      %1652 = vsyncadd [#allocation5], %s1651
      %s1653 = sshll.u32 [#allocation11], 4
      %s1654 = int_to_ptr.vmem [resolvable:$true] %s1653
      %1659 = dma.vmem_to_hbm [thread:$0]  %s1654, 256, %s9, [#allocation5], 128, 128, 8
    $region57: #{tpu_custom_call.1} parent=1 // pred_fallthru
      _
    // Predicated region
    $region58: #{tpu_custom_call.1} parent=1 // pred_check
      _
    $region59: #{tpu_custom_call.1} parent=1 // pred_check_branch
      %1661 = sbr.rel (0) target = $region61
    $region60: #{tpu_custom_call.1} parent=1 // pred_region
      %1662 = dma.done [#allocation5], 256
    $region61: #{tpu_custom_call.1} parent=1 // pred_fallthru
      _
    %1663 = vsyncpa [#allocation4], 1
    %1664 = vsyncpa [#allocation7], 1
    %1665 = vsyncpa [#allocation10], 1
    %1666 = vsyncpa [#allocation5], 1

</llo_original>
